<compile_context>
chip_gen: v5e
topology: v5e:2x2
jax: 0.10.0
libtpu: 0.0.40
codegen_flags: <defaults>
</compile_context>

<pallas_src>
import math
import jax
import jax.numpy as jnp
from jax import lax
from jax.experimental import pallas as pl
from jax.experimental.pallas import tpu as pltpu

# ---- model constants (from CalvinFrameworkML.__init__) ----
EMBED = 128                      # quantum_embedding output dim
NUM_HEADS = 8
HEAD_DIM = EMBED // NUM_HEADS    # 16
FG_HIDDEN = 64                   # fractal_governance hidden dim
ETH_OUT = 64                     # CalvinFrameworkML output_dim (ethical_constraint)
K_FRACTAL = math.log(3.0) / math.log(2.0)

# ---- small demo shapes ----
BATCH = 8
INPUT_DIM = 32
D_DEMO = 8
NUM_CLASSES = 8
OUT_PAD = 128                    # lane-dense padded output width

# column offsets inside the packed (128, 768) "from-128-features" weight slab (bf16)
_QKV, _WO, _FG1, _ETH = 0, 384, 512, 640                     # widths 384/128/128/128
# column offsets inside the packed (128, 256) second weight slab (bf16)
_FG2, _HEAD_ETH = 0, 128                                     # widths 128/128
# column offsets inside the pre-broadcast (BATCH, 1152) f32 bias slab
_B_QE, _B_QKV, _B_WO, _B_FG1, _B_ETH, _B_FG2, _B_HEAD = 0, 128, 512, 640, 768, 896, 1024


def calvin_kernel(x_ref, demo_ref, qe_w_ref, w128_ref, w2_ref, wdemo_ref, bias_ref, out_ref):
    f32 = jnp.float32
    bf16 = jnp.bfloat16
    B = x_ref.shape[0]

    # --- x = sin(quantum_embedding(x)) ; x is (B, 32), weight (32, 128) bf16, f32 accum ---
    h = jnp.sin(
        jnp.dot(x_ref[...].astype(bf16), qe_w_ref[...], preferred_element_type=f32)
        + bias_ref[:, _B_QE:_B_QE + EMBED]
    )                                                          # (B, 128) f32

    # --- emergence_operator: fused QKV projection, H-major batched attention over batch axis ---
    qkv = (jnp.dot(h.astype(bf16), w128_ref[:, _QKV:_QKV + 3 * EMBED], preferred_element_type=f32)
           + bias_ref[:, _B_QKV:_B_QKV + 3 * EMBED])           # (B, 384) f32

    # single transpose in: (B, 3*H, D) -> (3*H, B, D); slices along the leading axis are free
    qkv_h = jnp.swapaxes(qkv.reshape(B, 3 * NUM_HEADS, HEAD_DIM), 0, 1)
    q = qkv_h[0:NUM_HEADS]                                     # (H, B, D)
    k = qkv_h[NUM_HEADS:2 * NUM_HEADS]                         # (H, B, D)
    v = qkv_h[2 * NUM_HEADS:3 * NUM_HEADS]                     # (H, B, D)

    scale = 1.0 / math.sqrt(HEAD_DIM)
    # scores: batch over H, contract D -> (H, B, B)
    s = lax.dot_general(q, k, (((2,), (2,)), ((0,), (0,))), preferred_element_type=f32) * scale
    s = s - jnp.max(s, axis=-1, keepdims=True)
    p = jnp.exp(s)
    p = p * pl.reciprocal(jnp.sum(p, axis=-1, keepdims=True), approx=True)
    # p @ v: batch over H, contract the key axis -> (H, B, D)
    attn_h = lax.dot_general(p, v, (((2,), (1,)), ((0,), (0,))), preferred_element_type=f32)
    # single transpose out: (H, B, D) -> (B, H, D) -> (B, 128)
    attn = jnp.swapaxes(attn_h, 0, 1).reshape(B, EMBED)

    # --- output projection + residual ---
    h = h + (jnp.dot(attn.astype(bf16), w128_ref[:, _WO:_WO + EMBED], preferred_element_type=f32)
             + bias_ref[:, _B_WO:_B_WO + EMBED])

    # --- fractal governance (keep original eps placement: log(||h|| + 1e-8)) ---
    nrm = jnp.sqrt(jnp.sum(h * h, axis=1, keepdims=True))      # torch.norm(dim=1)
    fscale = jnp.exp(K_FRACTAL * jnp.log(nrm + 1e-8))          # (B, 1)

    g = (jnp.dot(h.astype(bf16), w128_ref[:, _FG1:_FG1 + EMBED], preferred_element_type=f32)
         + bias_ref[:, _B_FG1:_B_FG1 + EMBED])                 # padded cols stay 0
    g = g * jax.nn.sigmoid(g)                                  # SiLU; SiLU(0) = 0 in pad cols
    g = (jnp.dot(g.astype(bf16), w2_ref[:, _FG2:_FG2 + EMBED], preferred_element_type=f32)
         + bias_ref[:, _B_FG2:_B_FG2 + EMBED])
    h = h + g * fscale

    # --- conscious_dropout: eval-mode identity ---
    # TODO(synk): training-mode dropout (p=0.2) via pltpu.prng_seed/prng_random_bits not implemented.

    # --- ethical constraint + sigmoid (pad cols become 0.5, killed by zero rows in W_eth_head) ---
    eth = jax.nn.sigmoid(
        jnp.dot(h.astype(bf16), w128_ref[:, _ETH:_ETH + EMBED], preferred_element_type=f32)
        + bias_ref[:, _B_ETH:_B_ETH + EMBED]
    )                                                          # (B, 128)

    # --- MedicalDiagnosisModel head: split the concat into two dots (no lane-axis concat),
    #     lane-dense padded output (unmasked vst) ---
    out_ref[...] = (
        jnp.dot(eth.astype(bf16), w2_ref[:, _HEAD_ETH:_HEAD_ETH + OUT_PAD],
                preferred_element_type=f32)
        + jnp.dot(demo_ref[...].astype(bf16), wdemo_ref[...], preferred_element_type=f32)
        + bias_ref[:, _B_HEAD:_B_HEAD + OUT_PAD]
    )


def pack_params(p, batch):
    """Pack per-layer weights into lane-aligned bf16 slabs + one pre-broadcast f32 bias slab."""
    bf16 = jnp.bfloat16

    def padcols(w, n):
        return jnp.pad(w, ((0, 0), (0, n - w.shape[1])))

    def padrows(w, n):
        return jnp.pad(w, ((0, n - w.shape[0]), (0, 0)))

    qe_w = p["qe_w"].astype(bf16)                                       # (32, 128)

    wqkv = jnp.concatenate([p["wq"], p["wk"], p["wv"]], axis=1)         # (128, 384)
    fg1_w_pad = padcols(p["fg1_w"], EMBED)                              # (128, 128)
    eth_w_pad = padcols(p["eth_w"], EMBED)                              # (128, 128)
    w128 = jnp.concatenate([wqkv, p["wo"], fg1_w_pad, eth_w_pad], axis=1).astype(bf16)  # (128, 768)

    fg2_w_pad = padrows(p["fg2_w"], EMBED)                              # (128, 128)
    head_w_eth = padcols(padrows(p["head_w"][:ETH_OUT], EMBED), OUT_PAD)    # (128, 128)
    w2 = jnp.concatenate([fg2_w_pad, head_w_eth], axis=1).astype(bf16)  # (128, 256)

    w_demo = padcols(p["head_w"][ETH_OUT:], OUT_PAD).astype(bf16)       # (D_DEMO, 128)

    bqkv = jnp.concatenate([p["bq"], p["bk"], p["bv"]], axis=1)         # (1, 384)
    bias = jnp.concatenate(
        [p["qe_b"], bqkv, p["bo"],
         padcols(p["fg1_b"], EMBED), padcols(p["eth_b"], EMBED),
         p["fg2_b"], padcols(p["head_b"], OUT_PAD)],
        axis=1,
    )                                                                    # (1, 1152) f32
    bias = jnp.tile(bias, (batch, 1))                                    # pre-broadcast: (B, 1152)
    return {"qe_w": qe_w, "w128": w128, "w2": w2, "w_demo": w_demo, "bias": bias}


def medical_diagnosis_forward(x, demo, packed):
    B = x.shape[0]
    vmem = pltpu.MemorySpace.VMEM
    out_pad = pl.pallas_call(
        calvin_kernel,
        out_shape=jax.ShapeDtypeStruct((B, OUT_PAD), jnp.float32),       # lane-dense output
        in_specs=[pl.BlockSpec(memory_space=vmem)] * 7,
        out_specs=pl.BlockSpec(memory_space=vmem),
    )(x, demo, packed["qe_w"], packed["w128"], packed["w2"], packed["w_demo"], packed["bias"])
    return out_pad[:, :NUM_CLASSES]


def init_params(key):
    """Deterministic synthetic parameters (PyTorch (out,in) weights stored as (in,out))."""
    def lin(key, fan_in, fan_out, scale=0.05):
        kw, kb = jax.random.split(key)
        w = scale * jax.random.normal(kw, (fan_in, fan_out), jnp.float32)
        b = scale * jax.random.normal(kb, (1, fan_out), jnp.float32)
        return w, b

    keys = jax.random.split(key, 9)
    p = {}
    p["qe_w"], p["qe_b"] = lin(keys[0], INPUT_DIM, EMBED)
    p["wq"], p["bq"] = lin(keys[1], EMBED, EMBED)
    p["wk"], p["bk"] = lin(keys[2], EMBED, EMBED)
    p["wv"], p["bv"] = lin(keys[3], EMBED, EMBED)
    p["wo"], p["bo"] = lin(keys[4], EMBED, EMBED)
    p["fg1_w"], p["fg1_b"] = lin(keys[5], EMBED, FG_HIDDEN)
    p["fg2_w"], p["fg2_b"] = lin(keys[6], FG_HIDDEN, EMBED)
    p["eth_w"], p["eth_b"] = lin(keys[7], EMBED, ETH_OUT)
    p["head_w"], p["head_b"] = lin(keys[8], ETH_OUT + D_DEMO, NUM_CLASSES)
    return p


def reference_forward(x, demo, p):
    """Pure-JAX f32 reference mirroring the PyTorch forward (eval-mode dropout)."""
    h = jnp.sin(x @ p["qe_w"] + p["qe_b"])
    q = h @ p["wq"] + p["bq"]
    k = h @ p["wk"] + p["bk"]
    v = h @ p["wv"] + p["bv"]
    outs = []
    for hh in range(NUM_HEADS):
        lo = hh * HEAD_DIM
        qh, kh, vh = q[:, lo:lo + HEAD_DIM], k[:, lo:lo + HEAD_DIM], v[:, lo:lo + HEAD_DIM]
        s = (qh @ kh.T) / math.sqrt(HEAD_DIM)
        outs.append(jax.nn.softmax(s, axis=-1) @ vh)
    attn = jnp.concatenate(outs, axis=-1) @ p["wo"] + p["bo"]
    h = h + attn
    fscale = jnp.exp(K_FRACTAL * jnp.log(jnp.linalg.norm(h, axis=1, keepdims=True) + 1e-8))
    g = h @ p["fg1_w"] + p["fg1_b"]
    g = g * jax.nn.sigmoid(g)
    g = g @ p["fg2_w"] + p["fg2_b"]
    h = h + g * fscale
    eth = jax.nn.sigmoid(h @ p["eth_w"] + p["eth_b"])
    combined = jnp.concatenate([eth, demo], axis=1)
    return combined @ p["head_w"] + p["head_b"]


if __name__ == "__main__":
    key = jax.random.PRNGKey(0)
    kx, kd = jax.random.split(key)
    x = jax.random.normal(kx, (BATCH, INPUT_DIM), jnp.float32)
    demo = jax.random.normal(kd, (BATCH, D_DEMO), jnp.float32)

    params = init_params(jax.random.PRNGKey(42))
    packed = pack_params(params, BATCH)

    out = medical_diagnosis_forward(x, demo, packed)
    out = jax.block_until_ready(out)

    ref = reference_forward(x, demo, params)
    assert out.shape == (BATCH, NUM_CLASSES)
    # tolerance accounts for bf16 weight slabs + approx softmax reciprocal vs the f32 reference
    assert jnp.allclose(out, ref, atol=3e-2, rtol=3e-2), "kernel does not match reference"

    print("KERNEL_OK")
</pallas_src>

<mosaic_0001>
module attributes {stable_mosaic.version = 11 : i64} {
  func.func @calvin_kernel(%arg0: memref<8x32xf32, #tpu.memory_space<vmem>>, %arg1: memref<8x8xf32, #tpu.memory_space<vmem>>, %arg2: memref<32x128xbf16, #tpu.memory_space<vmem>>, %arg3: memref<128x768xbf16, #tpu.memory_space<vmem>>, %arg4: memref<128x256xbf16, #tpu.memory_space<vmem>>, %arg5: memref<8x128xbf16, #tpu.memory_space<vmem>>, %arg6: memref<8x1152xf32, #tpu.memory_space<vmem>>, %arg7: memref<8x128xf32, #tpu.memory_space<vmem>>) attributes {dimension_semantics = [], scalar_prefetch = 0 : i64, scratch_operands = 0 : i64, tpu.core_type = #tpu.core_type<tc>} {
    %c0 = arith.constant 0 : index
    %c0_0 = arith.constant 0 : index
    %0 = vector.load %arg0[%c0, %c0_0] : memref<8x32xf32, #tpu.memory_space<vmem>>, vector<8x32xf32>
    %1 = arith.truncf %0 : vector<8x32xf32> to vector<8x32xbf16>
    %c0_1 = arith.constant 0 : index
    %c0_2 = arith.constant 0 : index
    %2 = vector.load %arg2[%c0_1, %c0_2] : memref<32x128xbf16, #tpu.memory_space<vmem>>, vector<32x128xbf16>
    %cst = arith.constant dense<0.000000e+00> : vector<8x128xf32>
    %3 = tpu.matmul %1, %2, %cst {dimension_numbers = #tpu.dot_dimension_numbers<[1], [0], [0], [1], [0, 0, 1, 1], [], []>} : vector<8x32xbf16>, vector<32x128xbf16>, vector<8x128xf32> -> vector<8x128xf32>
    %c0_3 = arith.constant 0 : index
    %c0_4 = arith.constant 0 : index
    %4 = vector.load %arg6[%c0_3, %c0_4] : memref<8x1152xf32, #tpu.memory_space<vmem>>, vector<8x128xf32>
    %5 = arith.addf %3, %4 : vector<8x128xf32>
    %6 = math.sin %5 : vector<8x128xf32>
    %7 = arith.truncf %6 : vector<8x128xf32> to vector<8x128xbf16>
    %c0_5 = arith.constant 0 : index
    %c0_6 = arith.constant 0 : index
    %8 = vector.load %arg3[%c0_5, %c0_6] : memref<128x768xbf16, #tpu.memory_space<vmem>>, vector<128x384xbf16>
    %cst_7 = arith.constant dense<0.000000e+00> : vector<8x384xf32>
    %9 = tpu.matmul %7, %8, %cst_7 {dimension_numbers = #tpu.dot_dimension_numbers<[1], [0], [0], [1], [0, 0, 1, 1], [], []>} : vector<8x128xbf16>, vector<128x384xbf16>, vector<8x384xf32> -> vector<8x384xf32>
    %c0_8 = arith.constant 0 : index
    %c128 = arith.constant 128 : index
    %10 = vector.load %arg6[%c0_8, %c128] : memref<8x1152xf32, #tpu.memory_space<vmem>>, vector<8x384xf32>
    %11 = arith.addf %9, %10 : vector<8x384xf32>
    %12 = vector.shape_cast %11 : vector<8x384xf32> to vector<8x24x16xf32>
    %13 = tpu.transpose %12, [1, 0, 2] : vector<8x24x16xf32> -> vector<24x8x16xf32>
    %14 = vector.extract_strided_slice %13 {offsets = [0, 0, 0], sizes = [8, 8, 16], strides = [1, 1, 1]} : vector<24x8x16xf32> to vector<8x8x16xf32>
    %15 = vector.extract_strided_slice %13 {offsets = [8, 0, 0], sizes = [8, 8, 16], strides = [1, 1, 1]} : vector<24x8x16xf32> to vector<8x8x16xf32>
    %16 = vector.extract_strided_slice %13 {offsets = [16, 0, 0], sizes = [8, 8, 16], strides = [1, 1, 1]} : vector<24x8x16xf32> to vector<8x8x16xf32>
    %cst_9 = arith.constant dense<0.000000e+00> : vector<8x8x8xf32>
    %17 = tpu.matmul %14, %15, %cst_9 {dimension_numbers = #tpu.dot_dimension_numbers<[2], [2], [1], [1], [0, 0, 0, 1, 1, 1], [0], [0]>} : vector<8x8x16xf32>, vector<8x8x16xf32>, vector<8x8x8xf32> -> vector<8x8x8xf32>
    %cst_10 = arith.constant 2.500000e-01 : f32
    %18 = vector.broadcast %cst_10 : f32 to vector<8x8x8xf32>
    %19 = arith.mulf %17, %18 : vector<8x8x8xf32>
    %cst_11 = arith.constant dense<0xFF800000> : vector<8x8xf32>
    %20 = vector.multi_reduction <maximumf>, %19, %cst_11 [2] : vector<8x8x8xf32> to vector<8x8xf32>
    %21 = vector.shape_cast %20 : vector<8x8xf32> to vector<8x8x1xf32>
    %22 = vector.broadcast %21 : vector<8x8x1xf32> to vector<8x8x8xf32>
    %23 = arith.subf %19, %22 : vector<8x8x8xf32>
    %24 = math.exp %23 : vector<8x8x8xf32>
    %cst_12 = arith.constant dense<0.000000e+00> : vector<8x8xf32>
    %25 = vector.multi_reduction <add>, %24, %cst_12 [2] : vector<8x8x8xf32> to vector<8x8xf32>
    %26 = vector.shape_cast %25 : vector<8x8xf32> to vector<8x8x1xf32>
    %27 = tpu.reciprocal %26 {approx = true} : vector<8x8x1xf32> -> vector<8x8x1xf32>
    %28 = vector.broadcast %27 : vector<8x8x1xf32> to vector<8x8x8xf32>
    %29 = arith.mulf %24, %28 : vector<8x8x8xf32>
    %cst_13 = arith.constant dense<0.000000e+00> : vector<8x8x16xf32>
    %30 = tpu.matmul %29, %16, %cst_13 {dimension_numbers = #tpu.dot_dimension_numbers<[2], [1], [1], [2], [0, 0, 0, 1, 1, 2], [0], [0]>} : vector<8x8x8xf32>, vector<8x8x16xf32>, vector<8x8x16xf32> -> vector<8x8x16xf32>
    %31 = tpu.transpose %30, [1, 0, 2] : vector<8x8x16xf32> -> vector<8x8x16xf32>
    %32 = vector.shape_cast %31 : vector<8x8x16xf32> to vector<8x128xf32>
    %33 = arith.truncf %32 : vector<8x128xf32> to vector<8x128xbf16>
    %c0_14 = arith.constant 0 : index
    %c384 = arith.constant 384 : index
    %34 = vector.load %arg3[%c0_14, %c384] : memref<128x768xbf16, #tpu.memory_space<vmem>>, vector<128x128xbf16>
    %cst_15 = arith.constant dense<0.000000e+00> : vector<8x128xf32>
    %35 = tpu.matmul %33, %34, %cst_15 {dimension_numbers = #tpu.dot_dimension_numbers<[1], [0], [0], [1], [0, 0, 1, 1], [], []>} : vector<8x128xbf16>, vector<128x128xbf16>, vector<8x128xf32> -> vector<8x128xf32>
    %c0_16 = arith.constant 0 : index
    %c512 = arith.constant 512 : index
    %36 = vector.load %arg6[%c0_16, %c512] : memref<8x1152xf32, #tpu.memory_space<vmem>>, vector<8x128xf32>
    %37 = arith.addf %35, %36 : vector<8x128xf32>
    %38 = arith.addf %6, %37 : vector<8x128xf32>
    %39 = arith.mulf %38, %38 : vector<8x128xf32>
    %cst_17 = arith.constant dense<0.000000e+00> : vector<8xf32>
    %40 = vector.multi_reduction <add>, %39, %cst_17 [1] : vector<8x128xf32> to vector<8xf32>
    %41 = vector.shape_cast %40 : vector<8xf32> to vector<8x1xf32>
    %42 = math.sqrt %41 : vector<8x1xf32>
    %cst_18 = arith.constant 9.99999993E-9 : f32
    %43 = vector.broadcast %cst_18 : f32 to vector<8x1xf32>
    %44 = arith.addf %42, %43 : vector<8x1xf32>
    %45 = math.log %44 : vector<8x1xf32>
    %cst_19 = arith.constant 1.58496249 : f32
    %46 = vector.broadcast %cst_19 : f32 to vector<8x1xf32>
    %47 = arith.mulf %46, %45 : vector<8x1xf32>
    %48 = math.exp %47 : vector<8x1xf32>
    %49 = arith.truncf %38 : vector<8x128xf32> to vector<8x128xbf16>
    %c0_20 = arith.constant 0 : index
    %c512_21 = arith.constant 512 : index
    %50 = vector.load %arg3[%c0_20, %c512_21] : memref<128x768xbf16, #tpu.memory_space<vmem>>, vector<128x128xbf16>
    %cst_22 = arith.constant dense<0.000000e+00> : vector<8x128xf32>
    %51 = tpu.matmul %49, %50, %cst_22 {dimension_numbers = #tpu.dot_dimension_numbers<[1], [0], [0], [1], [0, 0, 1, 1], [], []>} : vector<8x128xbf16>, vector<128x128xbf16>, vector<8x128xf32> -> vector<8x128xf32>
    %c0_23 = arith.constant 0 : index
    %c640 = arith.constant 640 : index
    %52 = vector.load %arg6[%c0_23, %c640] : memref<8x1152xf32, #tpu.memory_space<vmem>>, vector<8x128xf32>
    %53 = arith.addf %51, %52 : vector<8x128xf32>
    %54 = arith.negf %53 : vector<8x128xf32>
    %55 = math.exp %54 : vector<8x128xf32>
    %cst_24 = arith.constant 1.000000e+00 : f32
    %56 = vector.broadcast %cst_24 : f32 to vector<8x128xf32>
    %57 = arith.addf %56, %55 : vector<8x128xf32>
    %58 = arith.divf %56, %57 : vector<8x128xf32>
    %59 = arith.mulf %53, %58 : vector<8x128xf32>
    %60 = arith.truncf %59 : vector<8x128xf32> to vector<8x128xbf16>
    %c0_25 = arith.constant 0 : index
    %c0_26 = arith.constant 0 : index
    %61 = vector.load %arg4[%c0_25, %c0_26] : memref<128x256xbf16, #tpu.memory_space<vmem>>, vector<128x128xbf16>
    %cst_27 = arith.constant dense<0.000000e+00> : vector<8x128xf32>
    %62 = tpu.matmul %60, %61, %cst_27 {dimension_numbers = #tpu.dot_dimension_numbers<[1], [0], [0], [1], [0, 0, 1, 1], [], []>} : vector<8x128xbf16>, vector<128x128xbf16>, vector<8x128xf32> -> vector<8x128xf32>
    %c0_28 = arith.constant 0 : index
    %c896 = arith.constant 896 : index
    %63 = vector.load %arg6[%c0_28, %c896] : memref<8x1152xf32, #tpu.memory_space<vmem>>, vector<8x128xf32>
    %64 = arith.addf %62, %63 : vector<8x128xf32>
    %65 = vector.broadcast %48 : vector<8x1xf32> to vector<8x128xf32>
    %66 = arith.mulf %64, %65 : vector<8x128xf32>
    %67 = arith.addf %38, %66 : vector<8x128xf32>
    %68 = arith.truncf %67 : vector<8x128xf32> to vector<8x128xbf16>
    %c0_29 = arith.constant 0 : index
    %c640_30 = arith.constant 640 : index
    %69 = vector.load %arg3[%c0_29, %c640_30] : memref<128x768xbf16, #tpu.memory_space<vmem>>, vector<128x128xbf16>
    %cst_31 = arith.constant dense<0.000000e+00> : vector<8x128xf32>
    %70 = tpu.matmul %68, %69, %cst_31 {dimension_numbers = #tpu.dot_dimension_numbers<[1], [0], [0], [1], [0, 0, 1, 1], [], []>} : vector<8x128xbf16>, vector<128x128xbf16>, vector<8x128xf32> -> vector<8x128xf32>
    %c0_32 = arith.constant 0 : index
    %c768 = arith.constant 768 : index
    %71 = vector.load %arg6[%c0_32, %c768] : memref<8x1152xf32, #tpu.memory_space<vmem>>, vector<8x128xf32>
    %72 = arith.addf %70, %71 : vector<8x128xf32>
    %73 = arith.negf %72 : vector<8x128xf32>
    %74 = math.exp %73 : vector<8x128xf32>
    %cst_33 = arith.constant 1.000000e+00 : f32
    %75 = vector.broadcast %cst_33 : f32 to vector<8x128xf32>
    %76 = arith.addf %75, %74 : vector<8x128xf32>
    %77 = arith.divf %75, %76 : vector<8x128xf32>
    %78 = arith.truncf %77 : vector<8x128xf32> to vector<8x128xbf16>
    %c0_34 = arith.constant 0 : index
    %c128_35 = arith.constant 128 : index
    %79 = vector.load %arg4[%c0_34, %c128_35] : memref<128x256xbf16, #tpu.memory_space<vmem>>, vector<128x128xbf16>
    %cst_36 = arith.constant dense<0.000000e+00> : vector<8x128xf32>
    %80 = tpu.matmul %78, %79, %cst_36 {dimension_numbers = #tpu.dot_dimension_numbers<[1], [0], [0], [1], [0, 0, 1, 1], [], []>} : vector<8x128xbf16>, vector<128x128xbf16>, vector<8x128xf32> -> vector<8x128xf32>
    %c0_37 = arith.constant 0 : index
    %c0_38 = arith.constant 0 : index
    %81 = vector.load %arg1[%c0_37, %c0_38] : memref<8x8xf32, #tpu.memory_space<vmem>>, vector<8x8xf32>
    %82 = arith.truncf %81 : vector<8x8xf32> to vector<8x8xbf16>
    %c0_39 = arith.constant 0 : index
    %c0_40 = arith.constant 0 : index
    %83 = vector.load %arg5[%c0_39, %c0_40] : memref<8x128xbf16, #tpu.memory_space<vmem>>, vector<8x128xbf16>
    %cst_41 = arith.constant dense<0.000000e+00> : vector<8x128xf32>
    %84 = tpu.matmul %82, %83, %cst_41 {dimension_numbers = #tpu.dot_dimension_numbers<[1], [0], [0], [1], [0, 0, 1, 1], [], []>} : vector<8x8xbf16>, vector<8x128xbf16>, vector<8x128xf32> -> vector<8x128xf32>
    %85 = arith.addf %80, %84 : vector<8x128xf32>
    %c0_42 = arith.constant 0 : index
    %c1024 = arith.constant 1024 : index
    %86 = vector.load %arg6[%c0_42, %c1024] : memref<8x1152xf32, #tpu.memory_space<vmem>>, vector<8x128xf32>
    %87 = arith.addf %85, %86 : vector<8x128xf32>
    %c0_43 = arith.constant 0 : index
    %c0_44 = arith.constant 0 : index
    %88 = vector.load %arg7[%c0_43, %c0_44] : memref<8x128xf32, #tpu.memory_space<vmem>>, vector<8x128xf32>
    tpu.vector_store %arg7[%c0_43, %c0_44], %87 {strides = array<i32>} : memref<8x128xf32, #tpu.memory_space<vmem>>, vector<8x128xf32>,
    return
  }
}

</mosaic_0001>

<llo_original>
// kernel: tpu_custom_call.1
$region0: #{tpu_custom_call.1}
  #allocation0 [shape = 'u32[]', space=smem, size = 0x4, offset = 0x4, fixed_abs, tag = 'smem constant byte address 0x4 - core index']
  #allocation1 [shape = 'u32[72,128]{1,0:T(1,128)}', space=vmem, size = 0x9000, scoped, tag = 'internal scratch']
  %s0 = inlined_call_operand.hbm [shape: f32[8,32], index: 0, kind: input, shape index: {}]
  %s1 = inlined_call_operand.hbm [shape: f32[8,8], index: 1, kind: input, shape index: {}]
  %s2 = inlined_call_operand.hbm [shape: bf16[32,128], index: 2, kind: input, shape index: {}]
  %s3 = inlined_call_operand.hbm [shape: bf16[128,768], index: 3, kind: input, shape index: {}]
  %s4 = inlined_call_operand.hbm [shape: bf16[128,256], index: 4, kind: input, shape index: {}]
  %s5 = inlined_call_operand.vmem [shape: bf16[8,128], index: 5, kind: input, shape index: {}]
  %s6 = inlined_call_operand.hbm [shape: f32[8,1152], index: 6, kind: input, shape index: {}]
  %s7 = inlined_call_operand.hbm [shape: f32[8,128], index: 7, kind: output, shape index: {}]
  %s8 = sld [smem:[#allocation0]]
  $region62: #{tpu_custom_call.1} parent=0
    _
  %s10 = ssub.s32 1, %s8
  %s11 = scalar_select 0, %s10, %s8
  $region1: #{tpu_custom_call.1} parent=0
    #allocation2 [shape = 'u8[4096]{0}', space=vmem, size = 0x1000, scoped, tag = 'input window, operand 0, single buffered']
    #allocation3 [shape = 's32[1]{0}', space=sflag, size = 0x4, scoped, tag = 'scoped memory for tpu_custom_call.1']
    #allocation4 [shape = 's32[1]{0}', space=sflag, size = 0x4, scoped, tag = 'scoped memory for tpu_custom_call.1']
    #allocation5 [shape = 'u8[4096]{0}', space=vmem, size = 0x1000, scoped, tag = 'input window, operand 1, single buffered']
    #allocation6 [shape = 's32[1]{0}', space=sflag, size = 0x4, scoped, tag = 'scoped memory for tpu_custom_call.1']
    #allocation7 [shape = 'u8[8192]{0}', space=vmem, size = 0x2000, scoped, tag = 'input window, operand 2, single buffered']
    #allocation8 [shape = 'u8[196608]{0}', space=vmem, size = 0x30000, scoped, tag = 'input window, operand 3, single buffered']
    #allocation9 [shape = 's32[1]{0}', space=sflag, size = 0x4, scoped, tag = 'scoped memory for tpu_custom_call.1']
    #allocation10 [shape = 'u8[65536]{0}', space=vmem, size = 0x10000, scoped, tag = 'input window, operand 4, single buffered']
    #allocation11 [shape = 'u8[36864]{0}', space=vmem, size = 0x9000, scoped, tag = 'input window, operand 6, single buffered']
    #allocation12 [shape = 's32[1]{0}', space=sflag, size = 0x4, scoped, tag = 'scoped memory for tpu_custom_call.1']
    #allocation13 [shape = 'u8[4096]{0}', space=vmem, size = 0x1000, scoped, tag = 'output window, operand 0, single buffered']
    %12 = vsyncpa [#allocation3], 0
    %13 = vsyncpa [#allocation6], 0
    %14 = vsyncpa [#allocation9], 0
    %15 = vsyncpa [#allocation12], 0
    %16 = vsyncpa [#allocation4], 0
    // Predicated region
    $region2: #{tpu_custom_call.1} parent=1 // pred_check
      _
    $region3: #{tpu_custom_call.1} parent=1 // pred_check_branch
      %18 = sbr.rel (0) target = $region5
    $region4: #{tpu_custom_call.1} parent=1 // pred_region
      %20 = vsyncadd [#allocation3], 0
      %s22 = sshll.u32 %s0, 4
      %s23 = int_to_ptr.hbm [resolvable:$true] %s22
      %s24 = sshll.u32 [#allocation2], 4
      %s25 = int_to_ptr.vmem [resolvable:$true] %s24
      %27 = dma.hbm_to_vmem [thread:$0]  %s23, 128, %s25, [#allocation3]
    $region5: #{tpu_custom_call.1} parent=1 // pred_fallthru
      _
    // Predicated region
    $region6: #{tpu_custom_call.1} parent=1 // pred_check
      _
    $region7: #{tpu_custom_call.1} parent=1 // pred_check_branch
      %29 = sbr.rel (0) target = $region9
    $region8: #{tpu_custom_call.1} parent=1 // pred_region
      %31 = vsyncadd [#allocation6], 0
      %s33 = sshll.u32 %s1, 4
      %s34 = int_to_ptr.hbm [resolvable:$true] %s33
      %s35 = sshll.u32 [#allocation5], 4
      %s36 = int_to_ptr.vmem [resolvable:$true] %s35
      %38 = dma.hbm_to_vmem [thread:$0]  %s34, 128, %s36, [#allocation6]
    $region9: #{tpu_custom_call.1} parent=1 // pred_fallthru
      _
    // Predicated region
    $region10: #{tpu_custom_call.1} parent=1 // pred_check
      _
    $region11: #{tpu_custom_call.1} parent=1 // pred_check_branch
      %40 = sbr.rel (0) target = $region13
    $region12: #{tpu_custom_call.1} parent=1 // pred_region
      %42 = vsyncadd [#allocation6], 0
      %s43 = sshll.u32 %s2, 4
      %s44 = int_to_ptr.hbm [resolvable:$true] %s43
      %s45 = sshll.u32 [#allocation7], 4
      %s46 = int_to_ptr.vmem [resolvable:$true] %s45
      %51 = dma.hbm_to_vmem [thread:$0]  %s44, 256, %s46, [#allocation6], 64, 64, 4
    $region13: #{tpu_custom_call.1} parent=1 // pred_fallthru
      _
    // Predicated region
    $region14: #{tpu_custom_call.1} parent=1 // pred_check
      _
    $region15: #{tpu_custom_call.1} parent=1 // pred_check_branch
      %53 = sbr.rel (0) target = $region17
    $region16: #{tpu_custom_call.1} parent=1 // pred_region
      %55 = vsyncadd [#allocation9], 0
      %s56 = sshll.u32 %s3, 4
      %s57 = int_to_ptr.hbm [resolvable:$true] %s56
      %s58 = sshll.u32 [#allocation8], 4
      %s59 = int_to_ptr.vmem [resolvable:$true] %s58
      %64 = dma.hbm_to_vmem [thread:$0]  %s57, 6144, %s59, [#allocation9], 384, 384, 24
    $region17: #{tpu_custom_call.1} parent=1 // pred_fallthru
      _
    // Predicated region
    $region18: #{tpu_custom_call.1} parent=1 // pred_check
      _
    $region19: #{tpu_custom_call.1} parent=1 // pred_check_branch
      %66 = sbr.rel (0) target = $region21
    $region20: #{tpu_custom_call.1} parent=1 // pred_region
      %68 = vsyncadd [#allocation9], 0
      %s69 = sshll.u32 %s4, 4
      %s70 = int_to_ptr.hbm [resolvable:$true] %s69
      %s71 = sshll.u32 [#allocation10], 4
      %s72 = int_to_ptr.vmem [resolvable:$true] %s71
      %77 = dma.hbm_to_vmem [thread:$0]  %s70, 2048, %s72, [#allocation9], 128, 128, 8
    $region21: #{tpu_custom_call.1} parent=1 // pred_fallthru
      _
    // Predicated region
    $region22: #{tpu_custom_call.1} parent=1 // pred_check
      _
    $region23: #{tpu_custom_call.1} parent=1 // pred_check_branch
      %79 = sbr.rel (0) target = $region25
    $region24: #{tpu_custom_call.1} parent=1 // pred_region
      _
    $region25: #{tpu_custom_call.1} parent=1 // pred_fallthru
      _
    // Predicated region
    $region26: #{tpu_custom_call.1} parent=1 // pred_check
      _
    $region27: #{tpu_custom_call.1} parent=1 // pred_check_branch
      %81 = sbr.rel (0) target = $region29
    $region28: #{tpu_custom_call.1} parent=1 // pred_region
      %83 = vsyncadd [#allocation12], 0
      %s85 = sshll.u32 %s6, 4
      %s86 = int_to_ptr.hbm [resolvable:$true] %s85
      %s87 = sshll.u32 [#allocation11], 4
      %s88 = int_to_ptr.vmem [resolvable:$true] %s87
      %90 = dma.hbm_to_vmem [thread:$0]  %s86, 1152, %s88, [#allocation12]
    $region29: #{tpu_custom_call.1} parent=1 // pred_fallthru
      _
    // Predicated region
    $region30: #{tpu_custom_call.1} parent=1 // pred_check
      _
    $region31: #{tpu_custom_call.1} parent=1 // pred_check_branch
      %92 = sbr.rel (0) target = $region33
    $region32: #{tpu_custom_call.1} parent=1 // pred_region
      %94 = dma.done [#allocation3], 128
    $region33: #{tpu_custom_call.1} parent=1 // pred_fallthru
      _
    // Predicated region
    $region34: #{tpu_custom_call.1} parent=1 // pred_check
      _
    $region35: #{tpu_custom_call.1} parent=1 // pred_check_branch
      %96 = sbr.rel (0) target = $region37
    $region36: #{tpu_custom_call.1} parent=1 // pred_region
      %98 = dma.done [#allocation6], 128
    $region37: #{tpu_custom_call.1} parent=1 // pred_fallthru
      _
    // Predicated region
    $region38: #{tpu_custom_call.1} parent=1 // pred_check
      _
    $region39: #{tpu_custom_call.1} parent=1 // pred_check_branch
      %100 = sbr.rel (0) target = $region41
    $region40: #{tpu_custom_call.1} parent=1 // pred_region
      %102 = dma.done [#allocation6], 256
    $region41: #{tpu_custom_call.1} parent=1 // pred_fallthru
      _
    // Predicated region
    $region42: #{tpu_custom_call.1} parent=1 // pred_check
      _
    $region43: #{tpu_custom_call.1} parent=1 // pred_check_branch
      %104 = sbr.rel (0) target = $region45
    $region44: #{tpu_custom_call.1} parent=1 // pred_region
      %106 = dma.done [#allocation9], 6144
    $region45: #{tpu_custom_call.1} parent=1 // pred_fallthru
      _
    // Predicated region
    $region46: #{tpu_custom_call.1} parent=1 // pred_check
      _
    $region47: #{tpu_custom_call.1} parent=1 // pred_check_branch
      %108 = sbr.rel (0) target = $region49
    $region48: #{tpu_custom_call.1} parent=1 // pred_region
      %110 = dma.done [#allocation9], 2048
    $region49: #{tpu_custom_call.1} parent=1 // pred_fallthru
      _
    // Predicated region
    $region50: #{tpu_custom_call.1} parent=1 // pred_check
      _
    $region51: #{tpu_custom_call.1} parent=1 // pred_check_branch
      %112 = sbr.rel (0) target = $region53
    $region52: #{tpu_custom_call.1} parent=1 // pred_region
      %114 = dma.done [#allocation12], 1152
    $region53: #{tpu_custom_call.1} parent=1 // pred_fallthru
      _
    %v116 = vld [vmem:[#allocation2] sm:$0xff]
    %v117 = vpack.c.bf16 %v116, %v116
    %v118 = vld [vmem:[#allocation7] sm:$0xf]
    %v119 = vld [vmem:[#allocation7 + $0x4] sm:$0xf]
    %v120 = vld [vmem:[#allocation7 + $0x8] sm:$0xf]
    %v121 = vld [vmem:[#allocation7 + $0xc] sm:$0xf]
    %v122 = vld [vmem:[#allocation11] sm:$0xff]
    %v127 = vunpack.c.l.b16 %v118
    %v128 = vunpack.c.l.b16 %v119
    %v129 = vunpack.c.l.b16 %v120
    %v130 = vunpack.c.l.b16 %v121
    %v131 = vpack.c.b16 %v128, %v127
    %v132 = vpack.c.b16 %v130, %v129
    %vm135 = vcmask 261120
    %v137 = vsel %vm135, %v117, 0
    %139 = vmatpush.bf16.msra.mxu0 0
    %140 = vmatpush.bf16.msra.mxu0 0
    %141 = vmatpush.bf16.msra.mxu0 0
    %142 = vmatpush.bf16.msra.mxu0 0
    %143 = vmatpush.bf16.msra.mxu0 0
    %144 = vmatpush.bf16.msra.mxu0 0
    %145 = vmatpush.bf16.msra.mxu0 %v132
    %146 = vmatpush.bf16.msra.mxu0 %v131
    %147 = vmatmul.bf16.gmra.mxu0 %v137
    %v148 = vpop.f32.mrf.mxu0
    %v149 = vadd.f32 %v122, %v148
    %v150 = vpop.f32.mrf.mxu0
    %151 = vdwg.mxu0
    %v152 = vand.u32 2147483647, %v149
    %vm153 = vcmp.le.f32.partialorder %v152, 0.7853982
    %vm154 = vcmp.lt.s32.totalorder %v149, 0
    %v155 = vand.u32 %v149, 2139095040
    %v156 = vshrl.u32 %v155, 23
    %v157 = vsub.s32 %v156, 127
    %v158 = vand.u32 2147483647, %v149
    %v159 = vand.u32 %v158, 8388607
    %v160 = vor.u32 %v159, 8388608
    %v161 = vsub.s32 0, %v160
    %v162 = vadd.s32 %v157, 1
    %vm163 = vcmp.gt.s32.totalorder %v162, 0
    %v164 = vsel %vm163, %v162, 0
    %v165 = vshrl.u32 %v164, 5
    %v166 = vand.u32 %v164, 31
    %v167 = vsub.s32 32, %v166
    %v168 = vshrl.u32 683565275, %v167
    %v169 = vshll.u32 683565275, %v166
    %v170 = vshrl.u32 2475754826, %v167
    %v171 = vor.u32 %v169, %v170
    %v172 = vshll.u32 2475754826, %v166
    %v173 = vshrl.u32 2131351028, %v167
    %v174 = vor.u32 %v172, %v173
    %v175 = vshll.u32 2131351028, %v166
    %v176 = vshrl.u32 2102212464, %v167
    %v177 = vor.u32 %v175, %v176
    %v178 = vshll.u32 2102212464, %v166
    %v179 = vshrl.u32 920167782, %v167
    %v180 = vor.u32 %v178, %v179
    %v181 = vshll.u32 920167782, %v166
    %v182 = vshrl.u32 1326507024, %v167
    %v183 = vor.u32 %v181, %v182
    %vm184 = vcmp.lt.s32.totalorder %v165, 1
    %vm185 = vcmp.lt.s32.totalorder %v165, 2
    %vm186 = vcmp.lt.s32.totalorder %v165, 3
    %vm187 = vcmp.lt.s32.totalorder %v165, 4
    %v188 = vsel %vm184, %v168, %v171
    %v189 = vsel %vm187, %v177, 2102212464
    %v190 = vsel %vm186, %v174, %v189
    %v191 = vsel %vm185, %v188, %v190
    %v192 = vsel %vm184, %v171, %v174
    %v193 = vsel %vm187, %v180, 920167782
    %v194 = vsel %vm186, %v177, %v193
    %v195 = vsel %vm185, %v192, %v194
    %v196 = vsel %vm184, %v174, %v177
    %v197 = vsel %vm187, %v183, 1326507024
    %v198 = vsel %vm186, %v180, %v197
    %v199 = vsel %vm185, %v196, %v198
    %v200 = vshll.u32 %v160, 8
    %v201 = vand.u32 %v200, 65535
    %v202 = vshrl.u32 %v200, 16
    %v203 = vand.u32 %v199, 65535
    %v204 = vshrl.u32 %v199, 16
    %v205 = vmul.u32 %v201, %v203
    %v206 = vmul.u32 %v201, %v204
    %v207 = vmul.u32 %v202, %v203
    %v208 = vmul.u32 %v202, %v204
    %v209 = vshll.u32 %v206, 16
    %v210 = vshrl.u32 %v206, 16
    %v211 = vshll.u32 %v207, 16
    %v212 = vshrl.u32 %v207, 16
    %vm213 = vc.u32 %v205, %v209
    %v214 = vsel %vm213, 1, 0
    %v215 = vadd.s32 %v205, %v209
    %v216 = vadd.s32 %v208, %v214
    %vm217 = vc.u32 %v215, %v211
    %v218 = vsel %vm217, 1, 0
    %v219 = vadd.s32 %v215, %v211
    %v220 = vadd.s32 %v216, %v218
    %v221 = vadd.s32 %v220, %v210
    %v222 = vadd.s32 %v221, %v212
    %v223 = vand.u32 %v200, 65535
    %v224 = vshrl.u32 %v200, 16
    %v225 = vand.u32 %v195, 65535
    %v226 = vshrl.u32 %v195, 16
    %v227 = vmul.u32 %v223, %v225
    %v228 = vmul.u32 %v223, %v226
    %v229 = vmul.u32 %v224, %v225
    %v230 = vmul.u32 %v224, %v226
    %v231 = vshll.u32 %v228, 16
    %v232 = vshrl.u32 %v228, 16
    %v233 = vshll.u32 %v229, 16
    %v234 = vshrl.u32 %v229, 16
    %vm235 = vc.u32 %v227, %v231
    %v236 = vsel %vm235, 1, 0
    %v237 = vadd.s32 %v227, %v231
    %v238 = vadd.s32 %v230, %v236
    %vm239 = vc.u32 %v237, %v233
    %v240 = vsel %vm239, 1, 0
    %v241 = vadd.s32 %v237, %v233
    %v242 = vadd.s32 %v238, %v240
    %v243 = vadd.s32 %v242, %v232
    %v244 = vadd.s32 %v243, %v234
    %v245 = vmul.u32 %v200, %v191
    %v246 = vadd.s32 %v222, %v241
    %vm247 = vc.u32 %v222, %v241
    %v248 = vadd.s32 %v244, 1
    %v249 = vsel %vm247, %v248, %v244
    %v250 = vadd.s32 %v245, %v249
    %v251 = vadd.s32 %v250, 536870912
    %v252 = vshrl.u32 %v251, 30
    %v253 = vshll.u32 %v252, 30
    %v254 = vsub.s32 %v250, %v253
    %vm255 = vcmp.lt.s32.totalorder %v254, 0
    %v256 = vsub.s32 0, %v254
    %v257 = vsel %vm255, %v256, %v254
    %v258 = vclz %v257
    %v259 = vsub.s32 %v258, 2
    %vm260 = vcmp.gt.s32.totalorder 0, %v259
    %v261 = vsel %vm260, 0, %v259
    %v262 = vsub.s32 32, %v261
    %v263 = vshll.u32 %v254, %v261
    %v264 = vshrl.u32 %v246, %v262
    %v265 = vor.u32 %v263, %v264
    %v266 = vsub.s32 4294967266, %v261
    %v267 = vadd.s32 %v266, 127
    %v268 = vshll.u32 %v267, 23
    %v269 = vor.u32 4788187, %v268
    %v270 = vand.u32 2147483647, %v269
    %v272 = vcvt.s32.f32 %v265
    %v273 = vmul.f32 %v272, %v270
    %v274 = vxor.u32 %v273, 2147483648
    %v275 = vsel %vm154, %v274, %v273
    %v276 = vsub.s32 4, %v252
    %v277 = vsel %vm154, %v276, %v252
    %v278 = vsel %vm153, %v149, %v275
    %v279 = vsel %vm153, 0, %v277
    %v280 = vmul.f32 %v278, %v278
    %v281 = vmul.f32 %v280, -0.001358992
    %v282 = vadd.f32 %v281, 0.041655596
    %v283 = vmul.f32 %v280, %v282
    %v284 = vadd.f32 %v283, -0.4999988
    %v285 = vmul.f32 %v280, %v284
    %v286 = vadd.f32 1.0, %v285
    %v287 = vmul.f32 %v278, %v278
    %v288 = vmul.f32 %v287, -0.00019511016
    %v289 = vadd.f32 %v288, 0.008332121
    %v290 = vmul.f32 %v287, %v289
    %v291 = vadd.f32 %v290, -0.16666654
    %v292 = vmul.f32 %v287, %v291
    %v293 = vadd.f32 %v292, 1.0
    %v294 = vmul.f32 %v293, %v278
    %vm295 = vweird.f32 %v149
    %v296 = vadd.s32 %v279, 3
    %v297 = vand.u32 %v296, 3
    %vm298 = vcmp.lt.s32.totalorder %v297, 2
    %vm299 = vcmp.eq.s32.totalorder %v297, 0
    %v300 = vxor.u32 %v294, 2147483648
    %v301 = vsel %vm299, %v286, %v300
    %vm302 = vcmp.eq.s32.totalorder %v297, 2
    %v303 = vxor.u32 %v286, 2147483648
    %v304 = vsel %vm302, %v303, %v294
    %v305 = vsel %vm298, %v301, %v304
    %v306 = vsel %vm295, nan, %v305
    %v307 = vpack.c.bf16 %v306, %v306
    %v308 = vld [vmem:[#allocation8] sm:$0xff]
    %v309 = vld [vmem:[#allocation8 + $0x8] sm:$0xf]
    %v310 = vld [vmem:[#allocation8 + $0x18] sm:$0xff]
    %v311 = vld [vmem:[#allocation8 + $0x20] sm:$0xf]
    %v312 = vld [vmem:[#allocation8 + $0x30] sm:$0xff]
    %v313 = vld [vmem:[#allocation8 + $0x38] sm:$0xf]
    %v314 = vld [vmem:[#allocation8 + $0x48] sm:$0xff]
    %v315 = vld [vmem:[#allocation8 + $0x50] sm:$0xf]
    %v316 = vld [vmem:[#allocation8 + $0x60] sm:$0xff]
    %v317 = vld [vmem:[#allocation8 + $0x68] sm:$0xf]
    %v318 = vld [vmem:[#allocation8 + $0x78] sm:$0xff]
    %v319 = vld [vmem:[#allocation8 + $0x80] sm:$0xf]
    %v320 = vld [vmem:[#allocation8 + $0x90] sm:$0xff]
    %v321 = vld [vmem:[#allocation8 + $0x98] sm:$0xf]
    %v322 = vld [vmem:[#allocation8 + $0xa8] sm:$0xff]
    %v323 = vld [vmem:[#allocation8 + $0xb0] sm:$0xf]
    %v324 = vld [vmem:[#allocation8 + $0xc0] sm:$0xff]
    %v325 = vld [vmem:[#allocation8 + $0xc8] sm:$0xf]
    %v326 = vld [vmem:[#allocation8 + $0xd8] sm:$0xff]
    %v327 = vld [vmem:[#allocation8 + $0xe0] sm:$0xf]
    %v328 = vld [vmem:[#allocation8 + $0xf0] sm:$0xff]
    %v329 = vld [vmem:[#allocation8 + $0xf8] sm:$0xf]
    %v330 = vld [vmem:[#allocation8 + $0x108] sm:$0xff]
    %v331 = vld [vmem:[#allocation8 + $0x110] sm:$0xf]
    %v332 = vld [vmem:[#allocation8 + $0x120] sm:$0xff]
    %v333 = vld [vmem:[#allocation8 + $0x128] sm:$0xf]
    %v334 = vld [vmem:[#allocation8 + $0x138] sm:$0xff]
    %v335 = vld [vmem:[#allocation8 + $0x140] sm:$0xf]
    %v336 = vld [vmem:[#allocation8 + $0x150] sm:$0xff]
    %v337 = vld [vmem:[#allocation8 + $0x158] sm:$0xf]
    %v338 = vld [vmem:[#allocation8 + $0x168] sm:$0xff]
    %v339 = vld [vmem:[#allocation8 + $0x170] sm:$0xf]
    %v340 = vld [vmem:[#allocation11 + $0x8] sm:$0xff]
    %v341 = vld [vmem:[#allocation11 + $0x10] sm:$0xff]
    %v342 = vld [vmem:[#allocation11 + $0x18] sm:$0xff]
    %v375 = vunpack.c.l.b16 %v308
    %v376 = vunpack.c.h.b16 %v308
    %v377 = vunpack.c.l.b16 %v309
    %v378 = vunpack.c.l.b16 %v310
    %v379 = vunpack.c.h.b16 %v310
    %v380 = vunpack.c.l.b16 %v311
    %v381 = vunpack.c.l.b16 %v312
    %v382 = vunpack.c.h.b16 %v312
    %v383 = vunpack.c.l.b16 %v313
    %v384 = vunpack.c.l.b16 %v314
    %v385 = vunpack.c.h.b16 %v314
    %v386 = vunpack.c.l.b16 %v315
    %v387 = vunpack.c.l.b16 %v316
    %v388 = vunpack.c.h.b16 %v316
    %v389 = vunpack.c.l.b16 %v317
    %v390 = vunpack.c.l.b16 %v318
    %v391 = vunpack.c.h.b16 %v318
    %v392 = vunpack.c.l.b16 %v319
    %v393 = vunpack.c.l.b16 %v320
    %v394 = vunpack.c.h.b16 %v320
    %v395 = vunpack.c.l.b16 %v321
    %v396 = vunpack.c.l.b16 %v322
    %v397 = vunpack.c.h.b16 %v322
    %v398 = vunpack.c.l.b16 %v323
    %v399 = vunpack.c.l.b16 %v324
    %v400 = vunpack.c.h.b16 %v324
    %v401 = vunpack.c.l.b16 %v325
    %v402 = vunpack.c.l.b16 %v326
    %v403 = vunpack.c.h.b16 %v326
    %v404 = vunpack.c.l.b16 %v327
    %v405 = vunpack.c.l.b16 %v328
    %v406 = vunpack.c.h.b16 %v328
    %v407 = vunpack.c.l.b16 %v329
    %v408 = vunpack.c.l.b16 %v330
    %v409 = vunpack.c.h.b16 %v330
    %v410 = vunpack.c.l.b16 %v331
    %v411 = vunpack.c.l.b16 %v332
    %v412 = vunpack.c.h.b16 %v332
    %v413 = vunpack.c.l.b16 %v333
    %v414 = vunpack.c.l.b16 %v334
    %v415 = vunpack.c.h.b16 %v334
    %v416 = vunpack.c.l.b16 %v335
    %v417 = vunpack.c.l.b16 %v336
    %v418 = vunpack.c.h.b16 %v336
    %v419 = vunpack.c.l.b16 %v337
    %v420 = vunpack.c.l.b16 %v338
    %v421 = vunpack.c.h.b16 %v338
    %v422 = vunpack.c.l.b16 %v339
    %v423 = vpack.c.b16 %v378, %v375
    %v424 = vpack.c.b16 %v379, %v376
    %v425 = vpack.c.b16 %v380, %v377
    %v426 = vpack.c.b16 %v384, %v381
    %v427 = vpack.c.b16 %v385, %v382
    %v428 = vpack.c.b16 %v386, %v383
    %v429 = vpack.c.b16 %v390, %v387
    %v430 = vpack.c.b16 %v391, %v388
    %v431 = vpack.c.b16 %v392, %v389
    %v432 = vpack.c.b16 %v396, %v393
    %v433 = vpack.c.b16 %v397, %v394
    %v434 = vpack.c.b16 %v398, %v395
    %v435 = vpack.c.b16 %v402, %v399
    %v436 = vpack.c.b16 %v403, %v400
    %v437 = vpack.c.b16 %v404, %v401
    %v438 = vpack.c.b16 %v408, %v405
    %v439 = vpack.c.b16 %v409, %v406
    %v440 = vpack.c.b16 %v410, %v407
    %v441 = vpack.c.b16 %v414, %v411
    %v442 = vpack.c.b16 %v415, %v412
    %v443 = vpack.c.b16 %v416, %v413
    %v444 = vpack.c.b16 %v420, %v417
    %v445 = vpack.c.b16 %v421, %v418
    %v446 = vpack.c.b16 %v422, %v419
    %471 = vmatpush.bf16.msra.mxu0 %v444
    %472 = vmatpush.bf16.msra.mxu0 %v441
    %473 = vmatpush.bf16.msra.mxu0 %v438
    %474 = vmatpush.bf16.msra.mxu0 %v435
    %475 = vmatpush.bf16.msra.mxu0 %v432
    %476 = vmatpush.bf16.msra.mxu0 %v429
    %477 = vmatpush.bf16.msra.mxu0 %v426
    %478 = vmatpush.bf16.msra.mxu0 %v423
    %479 = vmatmul.bf16.gmra.mxu0 %v307
    %v480 = vpop.f32.mrf.mxu0
    %v481 = vadd.f32 %v340, %v480
    %v482 = vpop.f32.mrf.mxu0
    %483 = vdwg.mxu0
    %484 = vmatpush.bf16.msra.mxu0 %v445
    %485 = vmatpush.bf16.msra.mxu0 %v442
    %486 = vmatpush.bf16.msra.mxu0 %v439
    %487 = vmatpush.bf16.msra.mxu0 %v436
    %488 = vmatpush.bf16.msra.mxu0 %v433
    %489 = vmatpush.bf16.msra.mxu0 %v430
    %490 = vmatpush.bf16.msra.mxu0 %v427
    %491 = vmatpush.bf16.msra.mxu0 %v424
    %492 = vmatmul.bf16.gmra.mxu0 %v307
    %v493 = vpop.f32.mrf.mxu0
    %v494 = vadd.f32 %v341, %v493
    %v495 = vpop.f32.mrf.mxu0
    %496 = vdwg.mxu0
    %497 = vmatpush.bf16.msra.mxu0 %v446
    %498 = vmatpush.bf16.msra.mxu0 %v443
    %499 = vmatpush.bf16.msra.mxu0 %v440
    %500 = vmatpush.bf16.msra.mxu0 %v437
    %501 = vmatpush.bf16.msra.mxu0 %v434
    %502 = vmatpush.bf16.msra.mxu0 %v431
    %503 = vmatpush.bf16.msra.mxu0 %v428
    %504 = vmatpush.bf16.msra.mxu0 %v425
    %505 = vmatmul.bf16.gmra.mxu0 %v307
    %v506 = vpop.f32.mrf.mxu0
    %v507 = vadd.f32 %v342, %v506
    %v508 = vpop.f32.mrf.mxu0
    %509 = vdwg.mxu0
    %511 = vrot.lane.b32.xlu0 %v481, 112
    %v512 = vpop.permute.xlu0 %511
    %514 = vrot.lane.b32.xlu0 %v481, 96
    %v515 = vpop.permute.xlu0 %514
    %517 = vrot.lane.b32.xlu0 %v481, 80
    %v518 = vpop.permute.xlu0 %517
    %520 = vrot.lane.b32.xlu0 %v481, 64
    %v521 = vpop.permute.xlu0 %520
    %523 = vrot.lane.b32.xlu0 %v481, 48
    %v524 = vpop.permute.xlu0 %523
    %526 = vrot.lane.b32.xlu0 %v481, 32
    %v527 = vpop.permute.xlu0 %526
    %529 = vrot.lane.b32.xlu0 %v481, 16
    %v530 = vpop.permute.xlu0 %529
    %533 = vrot.lane.b32.xlu0 %v494, 112
    %v534 = vpop.permute.xlu0 %533
    %536 = vrot.lane.b32.xlu0 %v494, 96
    %v537 = vpop.permute.xlu0 %536
    %539 = vrot.lane.b32.xlu0 %v494, 80
    %v540 = vpop.permute.xlu0 %539
    %542 = vrot.lane.b32.xlu0 %v494, 64
    %v543 = vpop.permute.xlu0 %542
    %545 = vrot.lane.b32.xlu0 %v494, 48
    %v546 = vpop.permute.xlu0 %545
    %548 = vrot.lane.b32.xlu0 %v494, 32
    %v549 = vpop.permute.xlu0 %548
    %551 = vrot.lane.b32.xlu0 %v494, 16
    %v552 = vpop.permute.xlu0 %551
    %555 = vrot.lane.b32.xlu0 %v507, 112
    %v556 = vpop.permute.xlu0 %555
    %558 = vrot.lane.b32.xlu0 %v507, 96
    %v559 = vpop.permute.xlu0 %558
    %561 = vrot.lane.b32.xlu0 %v507, 80
    %v562 = vpop.permute.xlu0 %561
    %564 = vrot.lane.b32.xlu0 %v507, 64
    %v565 = vpop.permute.xlu0 %564
    %567 = vrot.lane.b32.xlu0 %v507, 48
    %v568 = vpop.permute.xlu0 %567
    %570 = vrot.lane.b32.xlu0 %v507, 32
    %v571 = vpop.permute.xlu0 %570
    %573 = vrot.lane.b32.xlu0 %v507, 16
    %v574 = vpop.permute.xlu0 %573
    %v576 = vrot.slane %v515, 4
    %vm577 = vcmask 1047556
    %v578 = vsel %vm577, %v576, %v481
    %v579 = vrot.slane %v481, 4
    %v580 = vsel %vm577, %v515, %v579
    %v582 = vunpack.c.l.s4 1983009808
    %v583 = vunpack.c.0.s8 %v582
    %v584 = vperm.slane %v578, %v583
    %v586 = vunpack.c.l.s4 1983009808
    %v587 = vunpack.c.0.s8 %v586
    %v588 = vperm.slane %v580, %v587
    %v589 = vrot.slane %v518, 4
    %v590 = vsel %vm577, %v589, %v512
    %v591 = vrot.slane %v512, 4
    %v592 = vsel %vm577, %v518, %v591
    %v594 = vunpack.c.l.s4 1983009808
    %v595 = vunpack.c.0.s8 %v594
    %v596 = vperm.slane %v590, %v595
    %v598 = vunpack.c.l.s4 1983009808
    %v599 = vunpack.c.0.s8 %v598
    %v600 = vperm.slane %v592, %v599
    %v601 = vrot.slane %v527, 4
    %v602 = vsel %vm577, %v601, %v521
    %v603 = vrot.slane %v521, 4
    %v604 = vsel %vm577, %v527, %v603
    %v606 = vunpack.c.l.s4 1983009808
    %v607 = vunpack.c.0.s8 %v606
    %v608 = vperm.slane %v602, %v607
    %v610 = vunpack.c.l.s4 1983009808
    %v611 = vunpack.c.0.s8 %v610
    %v612 = vperm.slane %v604, %v611
    %v613 = vrot.slane %v530, 4
    %v614 = vsel %vm577, %v613, %v524
    %v615 = vrot.slane %v524, 4
    %v616 = vsel %vm577, %v530, %v615
    %v618 = vunpack.c.l.s4 1983009808
    %v619 = vunpack.c.0.s8 %v618
    %v620 = vperm.slane %v614, %v619
    %v622 = vunpack.c.l.s4 1983009808
    %v623 = vunpack.c.0.s8 %v622
    %v624 = vperm.slane %v616, %v623
    %v625 = vrot.slane %v596, 4
    %v626 = vsel %vm577, %v625, %v584
    %v627 = vrot.slane %v584, 4
    %v628 = vsel %vm577, %v596, %v627
    %v630 = vunpack.c.l.s4 1934713408
    %v631 = vunpack.c.0.s8 %v630
    %v632 = vperm.slane %v626, %v631
    %v634 = vunpack.c.l.s4 1934713408
    %v635 = vunpack.c.0.s8 %v634
    %v636 = vperm.slane %v628, %v635
    %v637 = vrot.slane %v600, 4
    %v638 = vsel %vm577, %v637, %v588
    %v639 = vrot.slane %v588, 4
    %v640 = vsel %vm577, %v600, %v639
    %v642 = vunpack.c.l.s4 1934713408
    %v643 = vunpack.c.0.s8 %v642
    %v644 = vperm.slane %v638, %v643
    %v646 = vunpack.c.l.s4 1934713408
    %v647 = vunpack.c.0.s8 %v646
    %v648 = vperm.slane %v640, %v647
    %v649 = vrot.slane %v620, 4
    %v650 = vsel %vm577, %v649, %v608
    %v651 = vrot.slane %v608, 4
    %v652 = vsel %vm577, %v620, %v651
    %v654 = vunpack.c.l.s4 1934713408
    %v655 = vunpack.c.0.s8 %v654
    %v656 = vperm.slane %v650, %v655
    %v658 = vunpack.c.l.s4 1934713408
    %v659 = vunpack.c.0.s8 %v658
    %v660 = vperm.slane %v652, %v659
    %v661 = vrot.slane %v624, 4
    %v662 = vsel %vm577, %v661, %v612
    %v663 = vrot.slane %v612, 4
    %v664 = vsel %vm577, %v624, %v663
    %v666 = vunpack.c.l.s4 1934713408
    %v667 = vunpack.c.0.s8 %v666
    %v668 = vperm.slane %v662, %v667
    %v670 = vunpack.c.l.s4 1934713408
    %v671 = vunpack.c.0.s8 %v670
    %v672 = vperm.slane %v664, %v671
    %v673 = vrot.slane %v656, 4
    %v674 = vsel %vm577, %v673, %v632
    %v675 = vrot.slane %v632, 4
    %v676 = vsel %vm577, %v656, %v675
    %v677 = vrot.slane %v660, 4
    %v678 = vsel %vm577, %v677, %v636
    %v679 = vrot.slane %v636, 4
    %v680 = vsel %vm577, %v660, %v679
    %v681 = vrot.slane %v668, 4
    %v682 = vsel %vm577, %v681, %v644
    %v683 = vrot.slane %v644, 4
    %v684 = vsel %vm577, %v668, %v683
    %v685 = vrot.slane %v672, 4
    %v686 = vsel %vm577, %v685, %v648
    %v687 = vrot.slane %v648, 4
    %v688 = vsel %vm577, %v672, %v687
    %v689 = vrot.slane %v537, 4
    %v690 = vsel %vm577, %v689, %v494
    %v691 = vrot.slane %v494, 4
    %v692 = vsel %vm577, %v537, %v691
    %v694 = vunpack.c.l.s4 1983009808
    %v695 = vunpack.c.0.s8 %v694
    %v696 = vperm.slane %v690, %v695
    %v698 = vunpack.c.l.s4 1983009808
    %v699 = vunpack.c.0.s8 %v698
    %v700 = vperm.slane %v692, %v699
    %v701 = vrot.slane %v540, 4
    %v702 = vsel %vm577, %v701, %v534
    %v703 = vrot.slane %v534, 4
    %v704 = vsel %vm577, %v540, %v703
    %v706 = vunpack.c.l.s4 1983009808
    %v707 = vunpack.c.0.s8 %v706
    %v708 = vperm.slane %v702, %v707
    %v710 = vunpack.c.l.s4 1983009808
    %v711 = vunpack.c.0.s8 %v710
    %v712 = vperm.slane %v704, %v711
    %v713 = vrot.slane %v549, 4
    %v714 = vsel %vm577, %v713, %v543
    %v715 = vrot.slane %v543, 4
    %v716 = vsel %vm577, %v549, %v715
    %v718 = vunpack.c.l.s4 1983009808
    %v719 = vunpack.c.0.s8 %v718
    %v720 = vperm.slane %v714, %v719
    %v722 = vunpack.c.l.s4 1983009808
    %v723 = vunpack.c.0.s8 %v722
    %v724 = vperm.slane %v716, %v723
    %v725 = vrot.slane %v552, 4
    %v726 = vsel %vm577, %v725, %v546
    %v727 = vrot.slane %v546, 4
    %v728 = vsel %vm577, %v552, %v727
    %v730 = vunpack.c.l.s4 1983009808
    %v731 = vunpack.c.0.s8 %v730
    %v732 = vperm.slane %v726, %v731
    %v734 = vunpack.c.l.s4 1983009808
    %v735 = vunpack.c.0.s8 %v734
    %v736 = vperm.slane %v728, %v735
    %v737 = vrot.slane %v708, 4
    %v738 = vsel %vm577, %v737, %v696
    %v739 = vrot.slane %v696, 4
    %v740 = vsel %vm577, %v708, %v739
    %v742 = vunpack.c.l.s4 1934713408
    %v743 = vunpack.c.0.s8 %v742
    %v744 = vperm.slane %v738, %v743
    %v746 = vunpack.c.l.s4 1934713408
    %v747 = vunpack.c.0.s8 %v746
    %v748 = vperm.slane %v740, %v747
    %v749 = vrot.slane %v712, 4
    %v750 = vsel %vm577, %v749, %v700
    %v751 = vrot.slane %v700, 4
    %v752 = vsel %vm577, %v712, %v751
    %v754 = vunpack.c.l.s4 1934713408
    %v755 = vunpack.c.0.s8 %v754
    %v756 = vperm.slane %v750, %v755
    %v758 = vunpack.c.l.s4 1934713408
    %v759 = vunpack.c.0.s8 %v758
    %v760 = vperm.slane %v752, %v759
    %v761 = vrot.slane %v732, 4
    %v762 = vsel %vm577, %v761, %v720
    %v763 = vrot.slane %v720, 4
    %v764 = vsel %vm577, %v732, %v763
    %v766 = vunpack.c.l.s4 1934713408
    %v767 = vunpack.c.0.s8 %v766
    %v768 = vperm.slane %v762, %v767
    %v770 = vunpack.c.l.s4 1934713408
    %v771 = vunpack.c.0.s8 %v770
    %v772 = vperm.slane %v764, %v771
    %v773 = vrot.slane %v736, 4
    %v774 = vsel %vm577, %v773, %v724
    %v775 = vrot.slane %v724, 4
    %v776 = vsel %vm577, %v736, %v775
    %v778 = vunpack.c.l.s4 1934713408
    %v779 = vunpack.c.0.s8 %v778
    %v780 = vperm.slane %v774, %v779
    %v782 = vunpack.c.l.s4 1934713408
    %v783 = vunpack.c.0.s8 %v782
    %v784 = vperm.slane %v776, %v783
    %v785 = vrot.slane %v768, 4
    %v786 = vsel %vm577, %v785, %v744
    %v787 = vrot.slane %v744, 4
    %v788 = vsel %vm577, %v768, %v787
    %v789 = vrot.slane %v772, 4
    %v790 = vsel %vm577, %v789, %v748
    %v791 = vrot.slane %v748, 4
    %v792 = vsel %vm577, %v772, %v791
    %v793 = vrot.slane %v780, 4
    %v794 = vsel %vm577, %v793, %v756
    %v795 = vrot.slane %v756, 4
    %v796 = vsel %vm577, %v780, %v795
    %v797 = vrot.slane %v784, 4
    %v798 = vsel %vm577, %v797, %v760
    %v799 = vrot.slane %v760, 4
    %v800 = vsel %vm577, %v784, %v799
    %v801 = vrot.slane %v559, 4
    %v802 = vsel %vm577, %v801, %v507
    %v803 = vrot.slane %v507, 4
    %v804 = vsel %vm577, %v559, %v803
    %v806 = vunpack.c.l.s4 1983009808
    %v807 = vunpack.c.0.s8 %v806
    %v808 = vperm.slane %v802, %v807
    %v810 = vunpack.c.l.s4 1983009808
    %v811 = vunpack.c.0.s8 %v810
    %v812 = vperm.slane %v804, %v811
    %v813 = vrot.slane %v562, 4
    %v814 = vsel %vm577, %v813, %v556
    %v815 = vrot.slane %v556, 4
    %v816 = vsel %vm577, %v562, %v815
    %v818 = vunpack.c.l.s4 1983009808
    %v819 = vunpack.c.0.s8 %v818
    %v820 = vperm.slane %v814, %v819
    %v822 = vunpack.c.l.s4 1983009808
    %v823 = vunpack.c.0.s8 %v822
    %v824 = vperm.slane %v816, %v823
    %v825 = vrot.slane %v571, 4
    %v826 = vsel %vm577, %v825, %v565
    %v827 = vrot.slane %v565, 4
    %v828 = vsel %vm577, %v571, %v827
    %v830 = vunpack.c.l.s4 1983009808
    %v831 = vunpack.c.0.s8 %v830
    %v832 = vperm.slane %v826, %v831
    %v834 = vunpack.c.l.s4 1983009808
    %v835 = vunpack.c.0.s8 %v834
    %v836 = vperm.slane %v828, %v835
    %v837 = vrot.slane %v574, 4
    %v838 = vsel %vm577, %v837, %v568
    %v839 = vrot.slane %v568, 4
    %v840 = vsel %vm577, %v574, %v839
    %v842 = vunpack.c.l.s4 1983009808
    %v843 = vunpack.c.0.s8 %v842
    %v844 = vperm.slane %v838, %v843
    %v846 = vunpack.c.l.s4 1983009808
    %v847 = vunpack.c.0.s8 %v846
    %v848 = vperm.slane %v840, %v847
    %v849 = vrot.slane %v820, 4
    %v850 = vsel %vm577, %v849, %v808
    %v851 = vrot.slane %v808, 4
    %v852 = vsel %vm577, %v820, %v851
    %v854 = vunpack.c.l.s4 1934713408
    %v855 = vunpack.c.0.s8 %v854
    %v856 = vperm.slane %v850, %v855
    %v858 = vunpack.c.l.s4 1934713408
    %v859 = vunpack.c.0.s8 %v858
    %v860 = vperm.slane %v852, %v859
    %v861 = vrot.slane %v824, 4
    %v862 = vsel %vm577, %v861, %v812
    %v863 = vrot.slane %v812, 4
    %v864 = vsel %vm577, %v824, %v863
    %v866 = vunpack.c.l.s4 1934713408
    %v867 = vunpack.c.0.s8 %v866
    %v868 = vperm.slane %v862, %v867
    %v870 = vunpack.c.l.s4 1934713408
    %v871 = vunpack.c.0.s8 %v870
    %v872 = vperm.slane %v864, %v871
    %v873 = vrot.slane %v844, 4
    %v874 = vsel %vm577, %v873, %v832
    %v875 = vrot.slane %v832, 4
    %v876 = vsel %vm577, %v844, %v875
    %v878 = vunpack.c.l.s4 1934713408
    %v879 = vunpack.c.0.s8 %v878
    %v880 = vperm.slane %v874, %v879
    %v882 = vunpack.c.l.s4 1934713408
    %v883 = vunpack.c.0.s8 %v882
    %v884 = vperm.slane %v876, %v883
    %v885 = vrot.slane %v848, 4
    %v886 = vsel %vm577, %v885, %v836
    %v887 = vrot.slane %v836, 4
    %v888 = vsel %vm577, %v848, %v887
    %v890 = vunpack.c.l.s4 1934713408
    %v891 = vunpack.c.0.s8 %v890
    %v892 = vperm.slane %v886, %v891
    %v894 = vunpack.c.l.s4 1934713408
    %v895 = vunpack.c.0.s8 %v894
    %v896 = vperm.slane %v888, %v895
    %v897 = vrot.slane %v880, 4
    %v898 = vsel %vm577, %v897, %v856
    %v899 = vrot.slane %v856, 4
    %v900 = vsel %vm577, %v880, %v899
    %v901 = vrot.slane %v884, 4
    %v902 = vsel %vm577, %v901, %v860
    %v903 = vrot.slane %v860, 4
    %v904 = vsel %vm577, %v884, %v903
    %v905 = vrot.slane %v892, 4
    %v906 = vsel %vm577, %v905, %v868
    %v907 = vrot.slane %v868, 4
    %v908 = vsel %vm577, %v892, %v907
    %v909 = vrot.slane %v896, 4
    %v910 = vsel %vm577, %v909, %v872
    %v911 = vrot.slane %v872, 4
    %v912 = vsel %vm577, %v896, %v911
    %v913 = vrot.slane %v678, 4
    %v914 = vsel %vm577, %v913, %v674
    %v915 = vrot.slane %v674, 4
    %v916 = vsel %vm577, %v678, %v915
    %v918 = vunpack.c.l.s4 1983009808
    %v919 = vunpack.c.0.s8 %v918
    %v920 = vperm.slane %v914, %v919
    %v922 = vunpack.c.l.s4 1983009808
    %v923 = vunpack.c.0.s8 %v922
    %v924 = vperm.slane %v916, %v923
    %v925 = vrot.slane %v680, 4
    %v926 = vsel %vm577, %v925, %v676
    %v927 = vrot.slane %v676, 4
    %v928 = vsel %vm577, %v680, %v927
    %v930 = vunpack.c.l.s4 1983009808
    %v931 = vunpack.c.0.s8 %v930
    %v932 = vperm.slane %v926, %v931
    %v934 = vunpack.c.l.s4 1983009808
    %v935 = vunpack.c.0.s8 %v934
    %v936 = vperm.slane %v928, %v935
    %v937 = vrot.slane %v686, 4
    %v938 = vsel %vm577, %v937, %v682
    %v939 = vrot.slane %v682, 4
    %v940 = vsel %vm577, %v686, %v939
    %v942 = vunpack.c.l.s4 1983009808
    %v943 = vunpack.c.0.s8 %v942
    %v944 = vperm.slane %v938, %v943
    %v946 = vunpack.c.l.s4 1983009808
    %v947 = vunpack.c.0.s8 %v946
    %v948 = vperm.slane %v940, %v947
    %v949 = vrot.slane %v688, 4
    %v950 = vsel %vm577, %v949, %v684
    %v951 = vrot.slane %v684, 4
    %v952 = vsel %vm577, %v688, %v951
    %v954 = vunpack.c.l.s4 1983009808
    %v955 = vunpack.c.0.s8 %v954
    %v956 = vperm.slane %v950, %v955
    %v958 = vunpack.c.l.s4 1983009808
    %v959 = vunpack.c.0.s8 %v958
    %v960 = vperm.slane %v952, %v959
    %v961 = vrot.slane %v932, 4
    %v962 = vsel %vm577, %v961, %v920
    %v963 = vrot.slane %v920, 4
    %v964 = vsel %vm577, %v932, %v963
    %v966 = vunpack.c.l.s4 1934713408
    %v967 = vunpack.c.0.s8 %v966
    %v968 = vperm.slane %v962, %v967
    %v970 = vunpack.c.l.s4 1934713408
    %v971 = vunpack.c.0.s8 %v970
    %v972 = vperm.slane %v964, %v971
    %v973 = vrot.slane %v936, 4
    %v974 = vsel %vm577, %v973, %v924
    %v975 = vrot.slane %v924, 4
    %v976 = vsel %vm577, %v936, %v975
    %v978 = vunpack.c.l.s4 1934713408
    %v979 = vunpack.c.0.s8 %v978
    %v980 = vperm.slane %v974, %v979
    %v982 = vunpack.c.l.s4 1934713408
    %v983 = vunpack.c.0.s8 %v982
    %v984 = vperm.slane %v976, %v983
    %v985 = vrot.slane %v956, 4
    %v986 = vsel %vm577, %v985, %v944
    %v987 = vrot.slane %v944, 4
    %v988 = vsel %vm577, %v956, %v987
    %v990 = vunpack.c.l.s4 1934713408
    %v991 = vunpack.c.0.s8 %v990
    %v992 = vperm.slane %v986, %v991
    %v994 = vunpack.c.l.s4 1934713408
    %v995 = vunpack.c.0.s8 %v994
    %v996 = vperm.slane %v988, %v995
    %v997 = vrot.slane %v960, 4
    %v998 = vsel %vm577, %v997, %v948
    %v999 = vrot.slane %v948, 4
    %v1000 = vsel %vm577, %v960, %v999
    %v1002 = vunpack.c.l.s4 1934713408
    %v1003 = vunpack.c.0.s8 %v1002
    %v1004 = vperm.slane %v998, %v1003
    %v1006 = vunpack.c.l.s4 1934713408
    %v1007 = vunpack.c.0.s8 %v1006
    %v1008 = vperm.slane %v1000, %v1007
    %v1009 = vrot.slane %v992, 4
    %v1010 = vsel %vm577, %v1009, %v968
    %v1011 = vrot.slane %v968, 4
    %v1012 = vsel %vm577, %v992, %v1011
    %v1013 = vrot.slane %v996, 4
    %v1014 = vsel %vm577, %v1013, %v972
    %v1015 = vrot.slane %v972, 4
    %v1016 = vsel %vm577, %v996, %v1015
    %v1017 = vrot.slane %v1004, 4
    %v1018 = vsel %vm577, %v1017, %v980
    %v1019 = vrot.slane %v980, 4
    %v1020 = vsel %vm577, %v1004, %v1019
    %v1021 = vrot.slane %v1008, 4
    %v1022 = vsel %vm577, %v1021, %v984
    %v1023 = vrot.slane %v984, 4
    %v1024 = vsel %vm577, %v1008, %v1023
    %v1025 = vrot.slane %v790, 4
    %v1026 = vsel %vm577, %v1025, %v786
    %v1027 = vrot.slane %v786, 4
    %v1028 = vsel %vm577, %v790, %v1027
    %v1030 = vunpack.c.l.s4 1983009808
    %v1031 = vunpack.c.0.s8 %v1030
    %v1032 = vperm.slane %v1026, %v1031
    %v1034 = vunpack.c.l.s4 1983009808
    %v1035 = vunpack.c.0.s8 %v1034
    %v1036 = vperm.slane %v1028, %v1035
    %v1037 = vrot.slane %v792, 4
    %v1038 = vsel %vm577, %v1037, %v788
    %v1039 = vrot.slane %v788, 4
    %v1040 = vsel %vm577, %v792, %v1039
    %v1042 = vunpack.c.l.s4 1983009808
    %v1043 = vunpack.c.0.s8 %v1042
    %v1044 = vperm.slane %v1038, %v1043
    %v1046 = vunpack.c.l.s4 1983009808
    %v1047 = vunpack.c.0.s8 %v1046
    %v1048 = vperm.slane %v1040, %v1047
    %v1049 = vrot.slane %v798, 4
    %v1050 = vsel %vm577, %v1049, %v794
    %v1051 = vrot.slane %v794, 4
    %v1052 = vsel %vm577, %v798, %v1051
    %v1054 = vunpack.c.l.s4 1983009808
    %v1055 = vunpack.c.0.s8 %v1054
    %v1056 = vperm.slane %v1050, %v1055
    %v1058 = vunpack.c.l.s4 1983009808
    %v1059 = vunpack.c.0.s8 %v1058
    %v1060 = vperm.slane %v1052, %v1059
    %v1061 = vrot.slane %v800, 4
    %v1062 = vsel %vm577, %v1061, %v796
    %v1063 = vrot.slane %v796, 4
    %v1064 = vsel %vm577, %v800, %v1063
    %v1066 = vunpack.c.l.s4 1983009808
    %v1067 = vunpack.c.0.s8 %v1066
    %v1068 = vperm.slane %v1062, %v1067
    %v1070 = vunpack.c.l.s4 1983009808
    %v1071 = vunpack.c.0.s8 %v1070
    %v1072 = vperm.slane %v1064, %v1071
    %v1073 = vrot.slane %v1044, 4
    %v1074 = vsel %vm577, %v1073, %v1032
    %v1075 = vrot.slane %v1032, 4
    %v1076 = vsel %vm577, %v1044, %v1075
    %v1078 = vunpack.c.l.s4 1934713408
    %v1079 = vunpack.c.0.s8 %v1078
    %v1080 = vperm.slane %v1074, %v1079
    %v1082 = vunpack.c.l.s4 1934713408
    %v1083 = vunpack.c.0.s8 %v1082
    %v1084 = vperm.slane %v1076, %v1083
    %v1085 = vrot.slane %v1048, 4
    %v1086 = vsel %vm577, %v1085, %v1036
    %v1087 = vrot.slane %v1036, 4
    %v1088 = vsel %vm577, %v1048, %v1087
    %v1090 = vunpack.c.l.s4 1934713408
    %v1091 = vunpack.c.0.s8 %v1090
    %v1092 = vperm.slane %v1086, %v1091
    %v1094 = vunpack.c.l.s4 1934713408
    %v1095 = vunpack.c.0.s8 %v1094
    %v1096 = vperm.slane %v1088, %v1095
    %v1097 = vrot.slane %v1068, 4
    %v1098 = vsel %vm577, %v1097, %v1056
    %v1099 = vrot.slane %v1056, 4
    %v1100 = vsel %vm577, %v1068, %v1099
    %v1102 = vunpack.c.l.s4 1934713408
    %v1103 = vunpack.c.0.s8 %v1102
    %v1104 = vperm.slane %v1098, %v1103
    %v1106 = vunpack.c.l.s4 1934713408
    %v1107 = vunpack.c.0.s8 %v1106
    %v1108 = vperm.slane %v1100, %v1107
    %v1109 = vrot.slane %v1072, 4
    %v1110 = vsel %vm577, %v1109, %v1060
    %v1111 = vrot.slane %v1060, 4
    %v1112 = vsel %vm577, %v1072, %v1111
    %v1114 = vunpack.c.l.s4 1934713408
    %v1115 = vunpack.c.0.s8 %v1114
    %v1116 = vperm.slane %v1110, %v1115
    %v1118 = vunpack.c.l.s4 1934713408
    %v1119 = vunpack.c.0.s8 %v1118
    %v1120 = vperm.slane %v1112, %v1119
    %v1121 = vrot.slane %v1104, 4
    %v1122 = vsel %vm577, %v1121, %v1080
    %v1123 = vrot.slane %v1080, 4
    %v1124 = vsel %vm577, %v1104, %v1123
    %v1125 = vrot.slane %v1108, 4
    %v1126 = vsel %vm577, %v1125, %v1084
    %v1127 = vrot.slane %v1084, 4
    %v1128 = vsel %vm577, %v1108, %v1127
    %v1129 = vrot.slane %v1116, 4
    %v1130 = vsel %vm577, %v1129, %v1092
    %v1131 = vrot.slane %v1092, 4
    %v1132 = vsel %vm577, %v1116, %v1131
    %v1133 = vrot.slane %v1120, 4
    %v1134 = vsel %vm577, %v1133, %v1096
    %v1135 = vrot.slane %v1096, 4
    %v1136 = vsel %vm577, %v1120, %v1135
    %v1137 = vrot.slane %v902, 4
    %v1138 = vsel %vm577, %v1137, %v898
    %v1139 = vrot.slane %v898, 4
    %v1140 = vsel %vm577, %v902, %v1139
    %v1142 = vunpack.c.l.s4 1983009808
    %v1143 = vunpack.c.0.s8 %v1142
    %v1144 = vperm.slane %v1138, %v1143
    %v1146 = vunpack.c.l.s4 1983009808
    %v1147 = vunpack.c.0.s8 %v1146
    %v1148 = vperm.slane %v1140, %v1147
    %v1149 = vrot.slane %v904, 4
    %v1150 = vsel %vm577, %v1149, %v900
    %v1151 = vrot.slane %v900, 4
    %v1152 = vsel %vm577, %v904, %v1151
    %v1154 = vunpack.c.l.s4 1983009808
    %v1155 = vunpack.c.0.s8 %v1154
    %v1156 = vperm.slane %v1150, %v1155
    %v1158 = vunpack.c.l.s4 1983009808
    %v1159 = vunpack.c.0.s8 %v1158
    %v1160 = vperm.slane %v1152, %v1159
    %v1161 = vrot.slane %v910, 4
    %v1162 = vsel %vm577, %v1161, %v906
    %v1163 = vrot.slane %v906, 4
    %v1164 = vsel %vm577, %v910, %v1163
    %v1166 = vunpack.c.l.s4 1983009808
    %v1167 = vunpack.c.0.s8 %v1166
    %v1168 = vperm.slane %v1162, %v1167
    %v1170 = vunpack.c.l.s4 1983009808
    %v1171 = vunpack.c.0.s8 %v1170
    %v1172 = vperm.slane %v1164, %v1171
    %v1173 = vrot.slane %v912, 4
    %v1174 = vsel %vm577, %v1173, %v908
    %v1175 = vrot.slane %v908, 4
    %v1176 = vsel %vm577, %v912, %v1175
    %v1178 = vunpack.c.l.s4 1983009808
    %v1179 = vunpack.c.0.s8 %v1178
    %v1180 = vperm.slane %v1174, %v1179
    %v1182 = vunpack.c.l.s4 1983009808
    %v1183 = vunpack.c.0.s8 %v1182
    %v1184 = vperm.slane %v1176, %v1183
    %v1185 = vrot.slane %v1156, 4
    %v1186 = vsel %vm577, %v1185, %v1144
    %v1187 = vrot.slane %v1144, 4
    %v1188 = vsel %vm577, %v1156, %v1187
    %v1190 = vunpack.c.l.s4 1934713408
    %v1191 = vunpack.c.0.s8 %v1190
    %v1192 = vperm.slane %v1186, %v1191
    %v1194 = vunpack.c.l.s4 1934713408
    %v1195 = vunpack.c.0.s8 %v1194
    %v1196 = vperm.slane %v1188, %v1195
    %v1197 = vrot.slane %v1160, 4
    %v1198 = vsel %vm577, %v1197, %v1148
    %v1199 = vrot.slane %v1148, 4
    %v1200 = vsel %vm577, %v1160, %v1199
    %v1202 = vunpack.c.l.s4 1934713408
    %v1203 = vunpack.c.0.s8 %v1202
    %v1204 = vperm.slane %v1198, %v1203
    %v1206 = vunpack.c.l.s4 1934713408
    %v1207 = vunpack.c.0.s8 %v1206
    %v1208 = vperm.slane %v1200, %v1207
    %v1209 = vrot.slane %v1180, 4
    %v1210 = vsel %vm577, %v1209, %v1168
    %v1211 = vrot.slane %v1168, 4
    %v1212 = vsel %vm577, %v1180, %v1211
    %v1214 = vunpack.c.l.s4 1934713408
    %v1215 = vunpack.c.0.s8 %v1214
    %v1216 = vperm.slane %v1210, %v1215
    %v1218 = vunpack.c.l.s4 1934713408
    %v1219 = vunpack.c.0.s8 %v1218
    %v1220 = vperm.slane %v1212, %v1219
    %v1221 = vrot.slane %v1184, 4
    %v1222 = vsel %vm577, %v1221, %v1172
    %v1223 = vrot.slane %v1172, 4
    %v1224 = vsel %vm577, %v1184, %v1223
    %v1226 = vunpack.c.l.s4 1934713408
    %v1227 = vunpack.c.0.s8 %v1226
    %v1228 = vperm.slane %v1222, %v1227
    %v1230 = vunpack.c.l.s4 1934713408
    %v1231 = vunpack.c.0.s8 %v1230
    %v1232 = vperm.slane %v1224, %v1231
    %v1233 = vrot.slane %v1216, 4
    %v1234 = vsel %vm577, %v1233, %v1192
    %v1235 = vrot.slane %v1192, 4
    %v1236 = vsel %vm577, %v1216, %v1235
    %v1237 = vrot.slane %v1220, 4
    %v1238 = vsel %vm577, %v1237, %v1196
    %v1239 = vrot.slane %v1196, 4
    %v1240 = vsel %vm577, %v1220, %v1239
    %v1241 = vrot.slane %v1228, 4
    %v1242 = vsel %vm577, %v1241, %v1204
    %v1243 = vrot.slane %v1204, 4
    %v1244 = vsel %vm577, %v1228, %v1243
    %v1245 = vrot.slane %v1232, 4
    %v1246 = vsel %vm577, %v1245, %v1208
    %v1247 = vrot.slane %v1208, 4
    %v1248 = vsel %vm577, %v1232, %v1247
    %vm1249 = vcmask 130048
    %v1251 = vsel %vm1249, %v1010, 0
    %v1254 = vsel %vm1249, %v1122, 0
    %1256 = vmatpush.xpose.msra.mxu0 0.0
    %1257 = vmatpush.xpose.msra.mxu0 0.0
    %1258 = vmatpush.xpose.msra.mxu0 0.0
    %1259 = vmatpush.xpose.msra.mxu0 0.0
    %1260 = vmatpush.xpose.msra.mxu0 0.0
    %1261 = vmatpush.xpose.msra.mxu0 0.0
    %1262 = vmatpush.xpose.msra.mxu0 0.0
    %1263 = vmatpush.xpose.msra.mxu0 0.0
    %1264 = vmatpush.xpose.msra.mxu0 0.0
    %1265 = vmatpush.xpose.msra.mxu0 0.0
    %1266 = vmatpush.xpose.msra.mxu0 0.0
    %1267 = vmatpush.xpose.msra.mxu0 0.0
    %1268 = vmatpush.xpose.msra.mxu0 0.0
    %1269 = vmatpush.xpose.msra.mxu0 0.0
    %1270 = vmatpush.xpose.msra.mxu0 0.0
    %1271 = vmatpush.xpose.msra.mxu0 %v1254
    %1272 = vmatmul.f32.gmra.mxu0 %v1251
    %v1273 = vpop.f32.mrf.mxu0
    %v1274 = vadd.f32 0.0, %v1273
    %1275 = vdwg.mxu0
    %v1277 = vsel %vm1249, %v1012, 0
    %v1280 = vsel %vm1249, %v1124, 0
    %1282 = vmatpush.xpose.msra.mxu0 0.0
    %1283 = vmatpush.xpose.msra.mxu0 0.0
    %1284 = vmatpush.xpose.msra.mxu0 0.0
    %1285 = vmatpush.xpose.msra.mxu0 0.0
    %1286 = vmatpush.xpose.msra.mxu0 0.0
    %1287 = vmatpush.xpose.msra.mxu0 0.0
    %1288 = vmatpush.xpose.msra.mxu0 0.0
    %1289 = vmatpush.xpose.msra.mxu0 0.0
    %1290 = vmatpush.xpose.msra.mxu0 0.0
    %1291 = vmatpush.xpose.msra.mxu0 0.0
    %1292 = vmatpush.xpose.msra.mxu0 0.0
    %1293 = vmatpush.xpose.msra.mxu0 0.0
    %1294 = vmatpush.xpose.msra.mxu0 0.0
    %1295 = vmatpush.xpose.msra.mxu0 0.0
    %1296 = vmatpush.xpose.msra.mxu0 0.0
    %1297 = vmatpush.xpose.msra.mxu0 %v1280
    %1298 = vmatmul.f32.gmra.mxu0 %v1277
    %v1299 = vpop.f32.mrf.mxu0
    %v1300 = vadd.f32 0.0, %v1299
    %1301 = vdwg.mxu0
    %v1303 = vsel %vm1249, %v1014, 0
    %v1306 = vsel %vm1249, %v1126, 0
    %1308 = vmatpush.xpose.msra.mxu0 0.0
    %1309 = vmatpush.xpose.msra.mxu0 0.0
    %1310 = vmatpush.xpose.msra.mxu0 0.0
    %1311 = vmatpush.xpose.msra.mxu0 0.0
    %1312 = vmatpush.xpose.msra.mxu0 0.0
    %1313 = vmatpush.xpose.msra.mxu0 0.0
    %1314 = vmatpush.xpose.msra.mxu0 0.0
    %1315 = vmatpush.xpose.msra.mxu0 0.0
    %1316 = vmatpush.xpose.msra.mxu0 0.0
    %1317 = vmatpush.xpose.msra.mxu0 0.0
    %1318 = vmatpush.xpose.msra.mxu0 0.0
    %1319 = vmatpush.xpose.msra.mxu0 0.0
    %1320 = vmatpush.xpose.msra.mxu0 0.0
    %1321 = vmatpush.xpose.msra.mxu0 0.0
    %1322 = vmatpush.xpose.msra.mxu0 0.0
    %1323 = vmatpush.xpose.msra.mxu0 %v1306
    %1324 = vmatmul.f32.gmra.mxu0 %v1303
    %v1325 = vpop.f32.mrf.mxu0
    %v1326 = vadd.f32 0.0, %v1325
    %1327 = vdwg.mxu0
    %v1329 = vsel %vm1249, %v1016, 0
    %v1332 = vsel %vm1249, %v1128, 0
    %1334 = vmatpush.xpose.msra.mxu0 0.0
    %1335 = vmatpush.xpose.msra.mxu0 0.0
    %1336 = vmatpush.xpose.msra.mxu0 0.0
    %1337 = vmatpush.xpose.msra.mxu0 0.0
    %1338 = vmatpush.xpose.msra.mxu0 0.0
    %1339 = vmatpush.xpose.msra.mxu0 0.0
    %1340 = vmatpush.xpose.msra.mxu0 0.0
    %1341 = vmatpush.xpose.msra.mxu0 0.0
    %1342 = vmatpush.xpose.msra.mxu0 0.0
    %1343 = vmatpush.xpose.msra.mxu0 0.0
    %1344 = vmatpush.xpose.msra.mxu0 0.0
    %1345 = vmatpush.xpose.msra.mxu0 0.0
    %1346 = vmatpush.xpose.msra.mxu0 0.0
    %1347 = vmatpush.xpose.msra.mxu0 0.0
    %1348 = vmatpush.xpose.msra.mxu0 0.0
    %1349 = vmatpush.xpose.msra.mxu0 %v1332
    %1350 = vmatmul.f32.gmra.mxu0 %v1329
    %v1351 = vpop.f32.mrf.mxu0
    %v1352 = vadd.f32 0.0, %v1351
    %1353 = vdwg.mxu0
    %v1355 = vsel %vm1249, %v1018, 0
    %v1358 = vsel %vm1249, %v1130, 0
    %1360 = vmatpush.xpose.msra.mxu0 0.0
    %1361 = vmatpush.xpose.msra.mxu0 0.0
    %1362 = vmatpush.xpose.msra.mxu0 0.0
    %1363 = vmatpush.xpose.msra.mxu0 0.0
    %1364 = vmatpush.xpose.msra.mxu0 0.0
    %1365 = vmatpush.xpose.msra.mxu0 0.0
    %1366 = vmatpush.xpose.msra.mxu0 0.0
    %1367 = vmatpush.xpose.msra.mxu0 0.0
    %1368 = vmatpush.xpose.msra.mxu0 0.0
    %1369 = vmatpush.xpose.msra.mxu0 0.0
    %1370 = vmatpush.xpose.msra.mxu0 0.0
    %1371 = vmatpush.xpose.msra.mxu0 0.0
    %1372 = vmatpush.xpose.msra.mxu0 0.0
    %1373 = vmatpush.xpose.msra.mxu0 0.0
    %1374 = vmatpush.xpose.msra.mxu0 0.0
    %1375 = vmatpush.xpose.msra.mxu0 %v1358
    %1376 = vmatmul.f32.gmra.mxu0 %v1355
    %v1377 = vpop.f32.mrf.mxu0
    %v1378 = vadd.f32 0.0, %v1377
    %1379 = vdwg.mxu0
    %v1381 = vsel %vm1249, %v1020, 0
    %v1384 = vsel %vm1249, %v1132, 0
    %1386 = vmatpush.xpose.msra.mxu0 0.0
    %1387 = vmatpush.xpose.msra.mxu0 0.0
    %1388 = vmatpush.xpose.msra.mxu0 0.0
    %1389 = vmatpush.xpose.msra.mxu0 0.0
    %1390 = vmatpush.xpose.msra.mxu0 0.0
    %1391 = vmatpush.xpose.msra.mxu0 0.0
    %1392 = vmatpush.xpose.msra.mxu0 0.0
    %1393 = vmatpush.xpose.msra.mxu0 0.0
    %1394 = vmatpush.xpose.msra.mxu0 0.0
    %1395 = vmatpush.xpose.msra.mxu0 0.0
    %1396 = vmatpush.xpose.msra.mxu0 0.0
    %1397 = vmatpush.xpose.msra.mxu0 0.0
    %1398 = vmatpush.xpose.msra.mxu0 0.0
    %1399 = vmatpush.xpose.msra.mxu0 0.0
    %1400 = vmatpush.xpose.msra.mxu0 0.0
    %1401 = vmatpush.xpose.msra.mxu0 %v1384
    %1402 = vmatmul.f32.gmra.mxu0 %v1381
    %v1403 = vpop.f32.mrf.mxu0
    %v1404 = vadd.f32 0.0, %v1403
    %1405 = vdwg.mxu0
    %v1407 = vsel %vm1249, %v1022, 0
    %v1410 = vsel %vm1249, %v1134, 0
    %1412 = vmatpush.xpose.msra.mxu0 0.0
    %1413 = vmatpush.xpose.msra.mxu0 0.0
    %1414 = vmatpush.xpose.msra.mxu0 0.0
    %1415 = vmatpush.xpose.msra.mxu0 0.0
    %1416 = vmatpush.xpose.msra.mxu0 0.0
    %1417 = vmatpush.xpose.msra.mxu0 0.0
    %1418 = vmatpush.xpose.msra.mxu0 0.0
    %1419 = vmatpush.xpose.msra.mxu0 0.0
    %1420 = vmatpush.xpose.msra.mxu0 0.0
    %1421 = vmatpush.xpose.msra.mxu0 0.0
    %1422 = vmatpush.xpose.msra.mxu0 0.0
    %1423 = vmatpush.xpose.msra.mxu0 0.0
    %1424 = vmatpush.xpose.msra.mxu0 0.0
    %1425 = vmatpush.xpose.msra.mxu0 0.0
    %1426 = vmatpush.xpose.msra.mxu0 0.0
    %1427 = vmatpush.xpose.msra.mxu0 %v1410
    %1428 = vmatmul.f32.gmra.mxu0 %v1407
    %v1429 = vpop.f32.mrf.mxu0
    %v1430 = vadd.f32 0.0, %v1429
    %1431 = vdwg.mxu0
    %v1433 = vsel %vm1249, %v1024, 0
    %v1436 = vsel %vm1249, %v1136, 0
    %1438 = vmatpush.xpose.msra.mxu0 0.0
    %1439 = vmatpush.xpose.msra.mxu0 0.0
    %1440 = vmatpush.xpose.msra.mxu0 0.0
    %1441 = vmatpush.xpose.msra.mxu0 0.0
    %1442 = vmatpush.xpose.msra.mxu0 0.0
    %1443 = vmatpush.xpose.msra.mxu0 0.0
    %1444 = vmatpush.xpose.msra.mxu0 0.0
    %1445 = vmatpush.xpose.msra.mxu0 0.0
    %1446 = vmatpush.xpose.msra.mxu0 0.0
    %1447 = vmatpush.xpose.msra.mxu0 0.0
    %1448 = vmatpush.xpose.msra.mxu0 0.0
    %1449 = vmatpush.xpose.msra.mxu0 0.0
    %1450 = vmatpush.xpose.msra.mxu0 0.0
    %1451 = vmatpush.xpose.msra.mxu0 0.0
    %1452 = vmatpush.xpose.msra.mxu0 0.0
    %1453 = vmatpush.xpose.msra.mxu0 %v1436
    %1454 = vmatmul.f32.gmra.mxu0 %v1433
    %v1455 = vpop.f32.mrf.mxu0
    %v1456 = vadd.f32 0.0, %v1455
    %1457 = vdwg.mxu0
    %v1458 = vmul.f32 %v1274, 0.25
    %v1459 = vmul.f32 %v1300, 0.25
    %v1460 = vmul.f32 %v1326, 0.25
    %v1461 = vmul.f32 %v1352, 0.25
    %v1462 = vmul.f32 %v1378, 0.25
    %v1463 = vmul.f32 %v1404, 0.25
    %v1464 = vmul.f32 %v1430, 0.25
    %v1465 = vmul.f32 %v1456, 0.25
    %vm1466 = vcmask 64512
    %v1467 = vsel %vm1466, %v1458, -inf
    %1468 = vmax.xlane.f32.xlu0 %v1467
    %v1469 = vpop.xlane.xlu0 %1468
    %v1470 = vsel %vm1466, %v1459, -inf
    %1471 = vmax.xlane.f32.xlu0 %v1470
    %v1472 = vpop.xlane.xlu0 %1471
    %v1473 = vsel %vm1466, %v1460, -inf
    %1474 = vmax.xlane.f32.xlu0 %v1473
    %v1475 = vpop.xlane.xlu0 %1474
    %v1476 = vsel %vm1466, %v1461, -inf
    %1477 = vmax.xlane.f32.xlu0 %v1476
    %v1478 = vpop.xlane.xlu0 %1477
    %v1479 = vsel %vm1466, %v1462, -inf
    %1480 = vmax.xlane.f32.xlu0 %v1479
    %v1481 = vpop.xlane.xlu0 %1480
    %v1482 = vsel %vm1466, %v1463, -inf
    %1483 = vmax.xlane.f32.xlu0 %v1482
    %v1484 = vpop.xlane.xlu0 %1483
    %v1485 = vsel %vm1466, %v1464, -inf
    %1486 = vmax.xlane.f32.xlu0 %v1485
    %v1487 = vpop.xlane.xlu0 %1486
    %v1488 = vsel %vm1466, %v1465, -inf
    %1489 = vmax.xlane.f32.xlu0 %v1488
    %v1490 = vpop.xlane.xlu0 %1489
    %v1491 = vsub.f32 %v1458, %v1469
    %v1492 = vsub.f32 %v1459, %v1472
    %v1493 = vsub.f32 %v1460, %v1475
    %v1494 = vsub.f32 %v1461, %v1478
    %v1495 = vsub.f32 %v1462, %v1481
    %v1496 = vsub.f32 %v1463, %v1484
    %v1497 = vsub.f32 %v1464, %v1487
    %v1498 = vsub.f32 %v1465, %v1490
    %v1499 = vmul.f32 %v1491, 1.442695
    %v1500 = vpow.pop %v1499
    %v1501 = vmul.f32 %v1492, 1.442695
    %v1502 = vpow.pop %v1501
    %v1503 = vmul.f32 %v1493, 1.442695
    %v1504 = vpow.pop %v1503
    %v1505 = vmul.f32 %v1494, 1.442695
    %v1506 = vpow.pop %v1505
    %v1507 = vmul.f32 %v1495, 1.442695
    %v1508 = vpow.pop %v1507
    %v1509 = vmul.f32 %v1496, 1.442695
    %v1510 = vpow.pop %v1509
    %v1511 = vmul.f32 %v1497, 1.442695
    %v1512 = vpow.pop %v1511
    %v1513 = vmul.f32 %v1498, 1.442695
    %v1514 = vpow.pop %v1513
    %v1515 = vsel %vm1466, %v1500, 0.0
    %1516 = vadd.xlane.f32.xlu0 %v1515
    %v1517 = vpop.xlane.xlu0 %1516
    %v1518 = vsel %vm1466, %v1502, 0.0
    %1519 = vadd.xlane.f32.xlu0 %v1518
    %v1520 = vpop.xlane.xlu0 %1519
    %v1521 = vsel %vm1466, %v1504, 0.0
    %1522 = vadd.xlane.f32.xlu0 %v1521
    %v1523 = vpop.xlane.xlu0 %1522
    %v1524 = vsel %vm1466, %v1506, 0.0
    %1525 = vadd.xlane.f32.xlu0 %v1524
    %v1526 = vpop.xlane.xlu0 %1525
    %v1527 = vsel %vm1466, %v1508, 0.0
    %1528 = vadd.xlane.f32.xlu0 %v1527
    %v1529 = vpop.xlane.xlu0 %1528
    %v1530 = vsel %vm1466, %v1510, 0.0
    %1531 = vadd.xlane.f32.xlu0 %v1530
    %v1532 = vpop.xlane.xlu0 %1531
    %v1533 = vsel %vm1466, %v1512, 0.0
    %1534 = vadd.xlane.f32.xlu0 %v1533
    %v1535 = vpop.xlane.xlu0 %1534
    %v1536 = vsel %vm1466, %v1514, 0.0
    %1537 = vadd.xlane.f32.xlu0 %v1536
    %v1538 = vpop.xlane.xlu0 %1537
    %v1539 = vrcp.pop %v1517
    %v1540 = vrcp.pop %v1520
    %v1541 = vrcp.pop %v1523
    %v1542 = vrcp.pop %v1526
    %v1543 = vrcp.pop %v1529
    %v1544 = vrcp.pop %v1532
    %v1545 = vrcp.pop %v1535
    %v1546 = vrcp.pop %v1538
    %v1547 = vmul.f32 %v1500, %v1539
    %v1548 = vmul.f32 %v1502, %v1540
    %v1549 = vmul.f32 %v1504, %v1541
    %v1550 = vmul.f32 %v1506, %v1542
    %v1551 = vmul.f32 %v1508, %v1543
    %v1552 = vmul.f32 %v1510, %v1544
    %v1553 = vmul.f32 %v1512, %v1545
    %v1554 = vmul.f32 %v1514, %v1546
    %v1556 = vsel %vm1466, %v1547, 0
    %1558 = vmatpush.msra.mxu0 0.0
    %1559 = vmatpush.msra.mxu0 0.0
    %1560 = vmatpush.msra.mxu0 0.0
    %1561 = vmatpush.msra.mxu0 0.0
    %1562 = vmatpush.msra.mxu0 0.0
    %1563 = vmatpush.msra.mxu0 0.0
    %1564 = vmatpush.msra.mxu0 0.0
    %1565 = vmatpush.msra.mxu0 0.0
    %1566 = vmatpush.msra.mxu0 0.0
    %1567 = vmatpush.msra.mxu0 0.0
    %1568 = vmatpush.msra.mxu0 0.0
    %1569 = vmatpush.msra.mxu0 0.0
    %1570 = vmatpush.msra.mxu0 0.0
    %1571 = vmatpush.msra.mxu0 0.0
    %1572 = vmatpush.msra.mxu0 0.0
    %1573 = vmatpush.msra.mxu0 %v1234
    %1574 = vmatmul.f32.gmra.mxu0 %v1556
    %v1575 = vpop.f32.mrf.mxu0
    %v1576 = vadd.f32 0.0, %v1575
    %1577 = vdwg.mxu0
    %v1579 = vsel %vm1466, %v1548, 0
    %1581 = vmatpush.msra.mxu0 0.0
    %1582 = vmatpush.msra.mxu0 0.0
    %1583 = vmatpush.msra.mxu0 0.0
    %1584 = vmatpush.msra.mxu0 0.0
    %1585 = vmatpush.msra.mxu0 0.0
    %1586 = vmatpush.msra.mxu0 0.0
    %1587 = vmatpush.msra.mxu0 0.0
    %1588 = vmatpush.msra.mxu0 0.0
    %1589 = vmatpush.msra.mxu0 0.0
    %1590 = vmatpush.msra.mxu0 0.0
    %1591 = vmatpush.msra.mxu0 0.0
    %1592 = vmatpush.msra.mxu0 0.0
    %1593 = vmatpush.msra.mxu0 0.0
    %1594 = vmatpush.msra.mxu0 0.0
    %1595 = vmatpush.msra.mxu0 0.0
    %1596 = vmatpush.msra.mxu0 %v1236
    %1597 = vmatmul.f32.gmra.mxu0 %v1579
    %v1598 = vpop.f32.mrf.mxu0
    %v1599 = vadd.f32 0.0, %v1598
    %1600 = vdwg.mxu0
    %v1602 = vsel %vm1466, %v1549, 0
    %1604 = vmatpush.msra.mxu0 0.0
    %1605 = vmatpush.msra.mxu0 0.0
    %1606 = vmatpush.msra.mxu0 0.0
    %1607 = vmatpush.msra.mxu0 0.0
    %1608 = vmatpush.msra.mxu0 0.0
    %1609 = vmatpush.msra.mxu0 0.0
    %1610 = vmatpush.msra.mxu0 0.0
    %1611 = vmatpush.msra.mxu0 0.0
    %1612 = vmatpush.msra.mxu0 0.0
    %1613 = vmatpush.msra.mxu0 0.0
    %1614 = vmatpush.msra.mxu0 0.0
    %1615 = vmatpush.msra.mxu0 0.0
    %1616 = vmatpush.msra.mxu0 0.0
    %1617 = vmatpush.msra.mxu0 0.0
    %1618 = vmatpush.msra.mxu0 0.0
    %1619 = vmatpush.msra.mxu0 %v1238
    %1620 = vmatmul.f32.gmra.mxu0 %v1602
    %v1621 = vpop.f32.mrf.mxu0
    %v1622 = vadd.f32 0.0, %v1621
    %1623 = vdwg.mxu0
    %v1625 = vsel %vm1466, %v1550, 0
    %1627 = vmatpush.msra.mxu0 0.0
    %1628 = vmatpush.msra.mxu0 0.0
    %1629 = vmatpush.msra.mxu0 0.0
    %1630 = vmatpush.msra.mxu0 0.0
    %1631 = vmatpush.msra.mxu0 0.0
    %1632 = vmatpush.msra.mxu0 0.0
    %1633 = vmatpush.msra.mxu0 0.0
    %1634 = vmatpush.msra.mxu0 0.0
    %1635 = vmatpush.msra.mxu0 0.0
    %1636 = vmatpush.msra.mxu0 0.0
    %1637 = vmatpush.msra.mxu0 0.0
    %1638 = vmatpush.msra.mxu0 0.0
    %1639 = vmatpush.msra.mxu0 0.0
    %1640 = vmatpush.msra.mxu0 0.0
    %1641 = vmatpush.msra.mxu0 0.0
    %1642 = vmatpush.msra.mxu0 %v1240
    %1643 = vmatmul.f32.gmra.mxu0 %v1625
    %v1644 = vpop.f32.mrf.mxu0
    %v1645 = vadd.f32 0.0, %v1644
    %1646 = vdwg.mxu0
    %v1648 = vsel %vm1466, %v1551, 0
    %1650 = vmatpush.msra.mxu0 0.0
    %1651 = vmatpush.msra.mxu0 0.0
    %1652 = vmatpush.msra.mxu0 0.0
    %1653 = vmatpush.msra.mxu0 0.0
    %1654 = vmatpush.msra.mxu0 0.0
    %1655 = vmatpush.msra.mxu0 0.0
    %1656 = vmatpush.msra.mxu0 0.0
    %1657 = vmatpush.msra.mxu0 0.0
    %1658 = vmatpush.msra.mxu0 0.0
    %1659 = vmatpush.msra.mxu0 0.0
    %1660 = vmatpush.msra.mxu0 0.0
    %1661 = vmatpush.msra.mxu0 0.0
    %1662 = vmatpush.msra.mxu0 0.0
    %1663 = vmatpush.msra.mxu0 0.0
    %1664 = vmatpush.msra.mxu0 0.0
    %1665 = vmatpush.msra.mxu0 %v1242
    %1666 = vmatmul.f32.gmra.mxu0 %v1648
    %v1667 = vpop.f32.mrf.mxu0
    %v1668 = vadd.f32 0.0, %v1667
    %1669 = vdwg.mxu0
    %v1671 = vsel %vm1466, %v1552, 0
    %1673 = vmatpush.msra.mxu0 0.0
    %1674 = vmatpush.msra.mxu0 0.0
    %1675 = vmatpush.msra.mxu0 0.0
    %1676 = vmatpush.msra.mxu0 0.0
    %1677 = vmatpush.msra.mxu0 0.0
    %1678 = vmatpush.msra.mxu0 0.0
    %1679 = vmatpush.msra.mxu0 0.0
    %1680 = vmatpush.msra.mxu0 0.0
    %1681 = vmatpush.msra.mxu0 0.0
    %1682 = vmatpush.msra.mxu0 0.0
    %1683 = vmatpush.msra.mxu0 0.0
    %1684 = vmatpush.msra.mxu0 0.0
    %1685 = vmatpush.msra.mxu0 0.0
    %1686 = vmatpush.msra.mxu0 0.0
    %1687 = vmatpush.msra.mxu0 0.0
    %1688 = vmatpush.msra.mxu0 %v1244
    %1689 = vmatmul.f32.gmra.mxu0 %v1671
    %v1690 = vpop.f32.mrf.mxu0
    %v1691 = vadd.f32 0.0, %v1690
    %1692 = vdwg.mxu0
    %v1694 = vsel %vm1466, %v1553, 0
    %1696 = vmatpush.msra.mxu0 0.0
    %1697 = vmatpush.msra.mxu0 0.0
    %1698 = vmatpush.msra.mxu0 0.0
    %1699 = vmatpush.msra.mxu0 0.0
    %1700 = vmatpush.msra.mxu0 0.0
    %1701 = vmatpush.msra.mxu0 0.0
    %1702 = vmatpush.msra.mxu0 0.0
    %1703 = vmatpush.msra.mxu0 0.0
    %1704 = vmatpush.msra.mxu0 0.0
    %1705 = vmatpush.msra.mxu0 0.0
    %1706 = vmatpush.msra.mxu0 0.0
    %1707 = vmatpush.msra.mxu0 0.0
    %1708 = vmatpush.msra.mxu0 0.0
    %1709 = vmatpush.msra.mxu0 0.0
    %1710 = vmatpush.msra.mxu0 0.0
    %1711 = vmatpush.msra.mxu0 %v1246
    %1712 = vmatmul.f32.gmra.mxu0 %v1694
    %v1713 = vpop.f32.mrf.mxu0
    %v1714 = vadd.f32 0.0, %v1713
    %1715 = vdwg.mxu0
    %v1717 = vsel %vm1466, %v1554, 0
    %1719 = vmatpush.msra.mxu0 0.0
    %1720 = vmatpush.msra.mxu0 0.0
    %1721 = vmatpush.msra.mxu0 0.0
    %1722 = vmatpush.msra.mxu0 0.0
    %1723 = vmatpush.msra.mxu0 0.0
    %1724 = vmatpush.msra.mxu0 0.0
    %1725 = vmatpush.msra.mxu0 0.0
    %1726 = vmatpush.msra.mxu0 0.0
    %1727 = vmatpush.msra.mxu0 0.0
    %1728 = vmatpush.msra.mxu0 0.0
    %1729 = vmatpush.msra.mxu0 0.0
    %1730 = vmatpush.msra.mxu0 0.0
    %1731 = vmatpush.msra.mxu0 0.0
    %1732 = vmatpush.msra.mxu0 0.0
    %1733 = vmatpush.msra.mxu0 0.0
    %1734 = vmatpush.msra.mxu0 %v1248
    %1735 = vmatmul.f32.gmra.mxu0 %v1717
    %v1736 = vpop.f32.mrf.mxu0
    %v1737 = vadd.f32 0.0, %v1736
    %1738 = vdwg.mxu0
    %v1739 = vrot.slane %v1622, 4
    %v1740 = vsel %vm577, %v1739, %v1576
    %v1741 = vrot.slane %v1576, 4
    %v1742 = vsel %vm577, %v1622, %v1741
    %v1744 = vunpack.c.l.s4 1983009808
    %v1745 = vunpack.c.0.s8 %v1744
    %v1746 = vperm.slane %v1740, %v1745
    %v1748 = vunpack.c.l.s4 1983009808
    %v1749 = vunpack.c.0.s8 %v1748
    %v1750 = vperm.slane %v1742, %v1749
    %v1751 = vrot.slane %v1645, 4
    %v1752 = vsel %vm577, %v1751, %v1599
    %v1753 = vrot.slane %v1599, 4
    %v1754 = vsel %vm577, %v1645, %v1753
    %v1756 = vunpack.c.l.s4 1983009808
    %v1757 = vunpack.c.0.s8 %v1756
    %v1758 = vperm.slane %v1752, %v1757
    %v1760 = vunpack.c.l.s4 1983009808
    %v1761 = vunpack.c.0.s8 %v1760
    %v1762 = vperm.slane %v1754, %v1761
    %v1763 = vrot.slane %v1714, 4
    %v1764 = vsel %vm577, %v1763, %v1668
    %v1765 = vrot.slane %v1668, 4
    %v1766 = vsel %vm577, %v1714, %v1765
    %v1768 = vunpack.c.l.s4 1983009808
    %v1769 = vunpack.c.0.s8 %v1768
    %v1770 = vperm.slane %v1764, %v1769
    %v1772 = vunpack.c.l.s4 1983009808
    %v1773 = vunpack.c.0.s8 %v1772
    %v1774 = vperm.slane %v1766, %v1773
    %v1775 = vrot.slane %v1737, 4
    %v1776 = vsel %vm577, %v1775, %v1691
    %v1777 = vrot.slane %v1691, 4
    %v1778 = vsel %vm577, %v1737, %v1777
    %v1780 = vunpack.c.l.s4 1983009808
    %v1781 = vunpack.c.0.s8 %v1780
    %v1782 = vperm.slane %v1776, %v1781
    %v1784 = vunpack.c.l.s4 1983009808
    %v1785 = vunpack.c.0.s8 %v1784
    %v1786 = vperm.slane %v1778, %v1785
    %v1787 = vrot.slane %v1758, 4
    %v1788 = vsel %vm577, %v1787, %v1746
    %v1789 = vrot.slane %v1746, 4
    %v1790 = vsel %vm577, %v1758, %v1789
    %v1792 = vunpack.c.l.s4 1934713408
    %v1793 = vunpack.c.0.s8 %v1792
    %v1794 = vperm.slane %v1788, %v1793
    %v1796 = vunpack.c.l.s4 1934713408
    %v1797 = vunpack.c.0.s8 %v1796
    %v1798 = vperm.slane %v1790, %v1797
    %v1799 = vrot.slane %v1762, 4
    %v1800 = vsel %vm577, %v1799, %v1750
    %v1801 = vrot.slane %v1750, 4
    %v1802 = vsel %vm577, %v1762, %v1801
    %v1804 = vunpack.c.l.s4 1934713408
    %v1805 = vunpack.c.0.s8 %v1804
    %v1806 = vperm.slane %v1800, %v1805
    %v1808 = vunpack.c.l.s4 1934713408
    %v1809 = vunpack.c.0.s8 %v1808
    %v1810 = vperm.slane %v1802, %v1809
    %v1811 = vrot.slane %v1782, 4
    %v1812 = vsel %vm577, %v1811, %v1770
    %v1813 = vrot.slane %v1770, 4
    %v1814 = vsel %vm577, %v1782, %v1813
    %v1816 = vunpack.c.l.s4 1934713408
    %v1817 = vunpack.c.0.s8 %v1816
    %v1818 = vperm.slane %v1812, %v1817
    %v1820 = vunpack.c.l.s4 1934713408
    %v1821 = vunpack.c.0.s8 %v1820
    %v1822 = vperm.slane %v1814, %v1821
    %v1823 = vrot.slane %v1786, 4
    %v1824 = vsel %vm577, %v1823, %v1774
    %v1825 = vrot.slane %v1774, 4
    %v1826 = vsel %vm577, %v1786, %v1825
    %v1828 = vunpack.c.l.s4 1934713408
    %v1829 = vunpack.c.0.s8 %v1828
    %v1830 = vperm.slane %v1824, %v1829
    %v1832 = vunpack.c.l.s4 1934713408
    %v1833 = vunpack.c.0.s8 %v1832
    %v1834 = vperm.slane %v1826, %v1833
    %v1835 = vrot.slane %v1818, 4
    %v1836 = vsel %vm577, %v1835, %v1794
    %v1837 = vrot.slane %v1794, 4
    %v1838 = vsel %vm577, %v1818, %v1837
    %v1839 = vrot.slane %v1822, 4
    %v1840 = vsel %vm577, %v1839, %v1798
    %v1841 = vrot.slane %v1798, 4
    %v1842 = vsel %vm577, %v1822, %v1841
    %v1843 = vrot.slane %v1830, 4
    %v1844 = vsel %vm577, %v1843, %v1806
    %v1845 = vrot.slane %v1806, 4
    %v1846 = vsel %vm577, %v1830, %v1845
    %v1847 = vrot.slane %v1834, 4
    %v1848 = vsel %vm577, %v1847, %v1810
    %v1849 = vrot.slane %v1810, 4
    %v1850 = vsel %vm577, %v1834, %v1849
    %v1851 = vrot.slane %v1840, 4
    %v1852 = vsel %vm577, %v1851, %v1836
    %v1853 = vrot.slane %v1836, 4
    %v1854 = vsel %vm577, %v1840, %v1853
    %v1856 = vunpack.c.l.s4 1983009808
    %v1857 = vunpack.c.0.s8 %v1856
    %v1858 = vperm.slane %v1852, %v1857
    %v1860 = vunpack.c.l.s4 1983009808
    %v1861 = vunpack.c.0.s8 %v1860
    %v1862 = vperm.slane %v1854, %v1861
    %v1863 = vrot.slane %v1842, 4
    %v1864 = vsel %vm577, %v1863, %v1838
    %v1865 = vrot.slane %v1838, 4
    %v1866 = vsel %vm577, %v1842, %v1865
    %v1868 = vunpack.c.l.s4 1983009808
    %v1869 = vunpack.c.0.s8 %v1868
    %v1870 = vperm.slane %v1864, %v1869
    %v1872 = vunpack.c.l.s4 1983009808
    %v1873 = vunpack.c.0.s8 %v1872
    %v1874 = vperm.slane %v1866, %v1873
    %v1875 = vrot.slane %v1848, 4
    %v1876 = vsel %vm577, %v1875, %v1844
    %v1877 = vrot.slane %v1844, 4
    %v1878 = vsel %vm577, %v1848, %v1877
    %v1880 = vunpack.c.l.s4 1983009808
    %v1881 = vunpack.c.0.s8 %v1880
    %v1882 = vperm.slane %v1876, %v1881
    %v1884 = vunpack.c.l.s4 1983009808
    %v1885 = vunpack.c.0.s8 %v1884
    %v1886 = vperm.slane %v1878, %v1885
    %v1887 = vrot.slane %v1850, 4
    %v1888 = vsel %vm577, %v1887, %v1846
    %v1889 = vrot.slane %v1846, 4
    %v1890 = vsel %vm577, %v1850, %v1889
    %v1892 = vunpack.c.l.s4 1983009808
    %v1893 = vunpack.c.0.s8 %v1892
    %v1894 = vperm.slane %v1888, %v1893
    %v1896 = vunpack.c.l.s4 1983009808
    %v1897 = vunpack.c.0.s8 %v1896
    %v1898 = vperm.slane %v1890, %v1897
    %v1899 = vrot.slane %v1870, 4
    %v1900 = vsel %vm577, %v1899, %v1858
    %v1901 = vrot.slane %v1858, 4
    %v1902 = vsel %vm577, %v1870, %v1901
    %v1904 = vunpack.c.l.s4 1934713408
    %v1905 = vunpack.c.0.s8 %v1904
    %v1906 = vperm.slane %v1900, %v1905
    %v1908 = vunpack.c.l.s4 1934713408
    %v1909 = vunpack.c.0.s8 %v1908
    %v1910 = vperm.slane %v1902, %v1909
    %v1911 = vrot.slane %v1874, 4
    %v1912 = vsel %vm577, %v1911, %v1862
    %v1913 = vrot.slane %v1862, 4
    %v1914 = vsel %vm577, %v1874, %v1913
    %v1916 = vunpack.c.l.s4 1934713408
    %v1917 = vunpack.c.0.s8 %v1916
    %v1918 = vperm.slane %v1912, %v1917
    %v1920 = vunpack.c.l.s4 1934713408
    %v1921 = vunpack.c.0.s8 %v1920
    %v1922 = vperm.slane %v1914, %v1921
    %v1923 = vrot.slane %v1894, 4
    %v1924 = vsel %vm577, %v1923, %v1882
    %v1925 = vrot.slane %v1882, 4
    %v1926 = vsel %vm577, %v1894, %v1925
    %v1928 = vunpack.c.l.s4 1934713408
    %v1929 = vunpack.c.0.s8 %v1928
    %v1930 = vperm.slane %v1924, %v1929
    %v1932 = vunpack.c.l.s4 1934713408
    %v1933 = vunpack.c.0.s8 %v1932
    %v1934 = vperm.slane %v1926, %v1933
    %v1935 = vrot.slane %v1898, 4
    %v1936 = vsel %vm577, %v1935, %v1886
    %v1937 = vrot.slane %v1886, 4
    %v1938 = vsel %vm577, %v1898, %v1937
    %v1940 = vunpack.c.l.s4 1934713408
    %v1941 = vunpack.c.0.s8 %v1940
    %v1942 = vperm.slane %v1936, %v1941
    %v1944 = vunpack.c.l.s4 1934713408
    %v1945 = vunpack.c.0.s8 %v1944
    %v1946 = vperm.slane %v1938, %v1945
    %v1947 = vrot.slane %v1930, 4
    %v1948 = vsel %vm577, %v1947, %v1906
    %v1949 = vrot.slane %v1906, 4
    %v1950 = vsel %vm577, %v1930, %v1949
    %v1951 = vrot.slane %v1934, 4
    %v1952 = vsel %vm577, %v1951, %v1910
    %v1953 = vrot.slane %v1910, 4
    %v1954 = vsel %vm577, %v1934, %v1953
    %v1955 = vrot.slane %v1942, 4
    %v1956 = vsel %vm577, %v1955, %v1918
    %v1957 = vrot.slane %v1918, 4
    %v1958 = vsel %vm577, %v1942, %v1957
    %v1959 = vrot.slane %v1946, 4
    %v1960 = vsel %vm577, %v1959, %v1922
    %v1961 = vrot.slane %v1922, 4
    %v1962 = vsel %vm577, %v1946, %v1961
    %1964 = vrot.lane.b32.xlu0 %v1950, 16
    %v1965 = vpop.permute.xlu0 %1964
    %1968 = vrot.lane.b32.xlu0 %v1952, 32
    %v1969 = vpop.permute.xlu0 %1968
    %1972 = vrot.lane.b32.xlu0 %v1954, 48
    %v1973 = vpop.permute.xlu0 %1972
    %1976 = vrot.lane.b32.xlu0 %v1956, 64
    %v1977 = vpop.permute.xlu0 %1976
    %1980 = vrot.lane.b32.xlu0 %v1958, 80
    %v1981 = vpop.permute.xlu0 %1980
    %1984 = vrot.lane.b32.xlu0 %v1960, 96
    %v1985 = vpop.permute.xlu0 %1984
    %1988 = vrot.lane.b32.xlu0 %v1962, 112
    %v1989 = vpop.permute.xlu0 %1988
    %v1991 = vsel %vm1249, %v1948, %v1965
    %v1992 = vsel %vm135, %v1991, %v1969
    %vm1993 = vcmask 392192
    %v1994 = vsel %vm1993, %v1992, %v1973
    %vm1995 = vcmask 523264
    %v1996 = vsel %vm1995, %v1994, %v1977
    %vm1997 = vcmask 654336
    %v1998 = vsel %vm1997, %v1996, %v1981
    %vm1999 = vcmask 785408
    %v2000 = vsel %vm1999, %v1998, %v1985
    %vm2001 = vcmask 916480
    %v2002 = vsel %vm2001, %v2000, %v1989
    %v2003 = vpack.c.bf16 %v2002, %v2002
    %v2004 = vld [vmem:[#allocation8 + $0xc] sm:$0xf]
    %v2005 = vld [vmem:[#allocation8 + $0x24] sm:$0xf]
    %v2006 = vld [vmem:[#allocation8 + $0x3c] sm:$0xf]
    %v2007 = vld [vmem:[#allocation8 + $0x54] sm:$0xf]
    %v2008 = vld [vmem:[#allocation8 + $0x6c] sm:$0xf]
    %v2009 = vld [vmem:[#allocation8 + $0x84] sm:$0xf]
    %v2010 = vld [vmem:[#allocation8 + $0x9c] sm:$0xf]
    %v2011 = vld [vmem:[#allocation8 + $0xb4] sm:$0xf]
    %v2012 = vld [vmem:[#allocation8 + $0xcc] sm:$0xf]
    %v2013 = vld [vmem:[#allocation8 + $0xe4] sm:$0xf]
    %v2014 = vld [vmem:[#allocation8 + $0xfc] sm:$0xf]
    %v2015 = vld [vmem:[#allocation8 + $0x114] sm:$0xf]
    %v2016 = vld [vmem:[#allocation8 + $0x12c] sm:$0xf]
    %v2017 = vld [vmem:[#allocation8 + $0x144] sm:$0xf]
    %v2018 = vld [vmem:[#allocation8 + $0x15c] sm:$0xf]
    %v2019 = vld [vmem:[#allocation8 + $0x174] sm:$0xf]
    %v2020 = vld [vmem:[#allocation11 + $0x20] sm:$0xff]
    %v2037 = vunpack.c.l.b16 %v2004
    %v2038 = vunpack.c.l.b16 %v2005
    %v2039 = vunpack.c.l.b16 %v2006
    %v2040 = vunpack.c.l.b16 %v2007
    %v2041 = vunpack.c.l.b16 %v2008
    %v2042 = vunpack.c.l.b16 %v2009
    %v2043 = vunpack.c.l.b16 %v2010
    %v2044 = vunpack.c.l.b16 %v2011
    %v2045 = vunpack.c.l.b16 %v2012
    %v2046 = vunpack.c.l.b16 %v2013
    %v2047 = vunpack.c.l.b16 %v2014
    %v2048 = vunpack.c.l.b16 %v2015
    %v2049 = vunpack.c.l.b16 %v2016
    %v2050 = vunpack.c.l.b16 %v2017
    %v2051 = vunpack.c.l.b16 %v2018
    %v2052 = vunpack.c.l.b16 %v2019
    %v2053 = vpack.c.b16 %v2038, %v2037
    %v2054 = vpack.c.b16 %v2040, %v2039
    %v2055 = vpack.c.b16 %v2042, %v2041
    %v2056 = vpack.c.b16 %v2044, %v2043
    %v2057 = vpack.c.b16 %v2046, %v2045
    %v2058 = vpack.c.b16 %v2048, %v2047
    %v2059 = vpack.c.b16 %v2050, %v2049
    %v2060 = vpack.c.b16 %v2052, %v2051
    %2069 = vmatpush.bf16.msra.mxu0 %v2060
    %2070 = vmatpush.bf16.msra.mxu0 %v2059
    %2071 = vmatpush.bf16.msra.mxu0 %v2058
    %2072 = vmatpush.bf16.msra.mxu0 %v2057
    %2073 = vmatpush.bf16.msra.mxu0 %v2056
    %2074 = vmatpush.bf16.msra.mxu0 %v2055
    %2075 = vmatpush.bf16.msra.mxu0 %v2054
    %2076 = vmatpush.bf16.msra.mxu0 %v2053
    %2077 = vmatmul.bf16.gmra.mxu0 %v2003
    %v2078 = vpop.f32.mrf.mxu0
    %v2079 = vadd.f32 %v2020, %v2078
    %v2080 = vpop.f32.mrf.mxu0
    %2081 = vdwg.mxu0
    %v2082 = vadd.f32 %v306, %v2079
    %v2083 = vmul.f32 %v2082, %v2082
    %2084 = vadd.xlane.f32.xlu0 %v2083
    %v2085 = vpop.xlane.xlu0 %2084
    %v2086 = vrsqrt.pop %v2085
    %v2087 = vmul.f32 %v2086, %v2085
    %v2088 = vmul.f32 %v2087, %v2086
    %v2089 = vmul.f32 0.5, %v2088
    %v2090 = vsub.f32 1.5, %v2089
    %v2091 = vmul.f32 %v2086, %v2090
    %v2092 = vmul.f32 %v2085, %v2091
    %vm2093 = vcmp.eq.f32.partialorder %v2085, inf
    %v2094 = vsel %vm2093, %v2085, %v2092
    %vm2095 = vcmp.eq.f32.partialorder %v2085, 0.0
    %v2096 = vand.u32 %v2085, 2147483648
    %v2097 = vsel %vm2095, %v2096, %v2094
    %v2098 = vadd.f32 %v2097, 1e-08
    %v2099 = vlog2.pop %v2098
    %v2100 = vmul.f32 %v2099, 0.6931472
    %v2101 = vmul.f32 %v2100, 1.5849625
    %v2102 = vmul.f32 %v2101, 1.442695
    %v2103 = vpow.pop %v2102
    %v2104 = vpack.c.bf16 %v2082, %v2082
    %v2105 = vld [vmem:[#allocation8 + $0x10] sm:$0xf]
    %v2106 = vld [vmem:[#allocation8 + $0x28] sm:$0xf]
    %v2107 = vld [vmem:[#allocation8 + $0x40] sm:$0xf]
    %v2108 = vld [vmem:[#allocation8 + $0x58] sm:$0xf]
    %v2109 = vld [vmem:[#allocation8 + $0x70] sm:$0xf]
    %v2110 = vld [vmem:[#allocation8 + $0x88] sm:$0xf]
    %v2111 = vld [vmem:[#allocation8 + $0xa0] sm:$0xf]
    %v2112 = vld [vmem:[#allocation8 + $0xb8] sm:$0xf]
    %v2113 = vld [vmem:[#allocation8 + $0xd0] sm:$0xf]
    %v2114 = vld [vmem:[#allocation8 + $0xe8] sm:$0xf]
    %v2115 = vld [vmem:[#allocation8 + $0x100] sm:$0xf]
    %v2116 = vld [vmem:[#allocation8 + $0x118] sm:$0xf]
    %v2117 = vld [vmem:[#allocation8 + $0x130] sm:$0xf]
    %v2118 = vld [vmem:[#allocation8 + $0x148] sm:$0xf]
    %v2119 = vld [vmem:[#allocation8 + $0x160] sm:$0xf]
    %v2120 = vld [vmem:[#allocation8 + $0x178] sm:$0xf]
    %v2121 = vld [vmem:[#allocation11 + $0x28] sm:$0xff]
    %v2138 = vunpack.c.l.b16 %v2105
    %v2139 = vunpack.c.l.b16 %v2106
    %v2140 = vunpack.c.l.b16 %v2107
    %v2141 = vunpack.c.l.b16 %v2108
    %v2142 = vunpack.c.l.b16 %v2109
    %v2143 = vunpack.c.l.b16 %v2110
    %v2144 = vunpack.c.l.b16 %v2111
    %v2145 = vunpack.c.l.b16 %v2112
    %v2146 = vunpack.c.l.b16 %v2113
    %v2147 = vunpack.c.l.b16 %v2114
    %v2148 = vunpack.c.l.b16 %v2115
    %v2149 = vunpack.c.l.b16 %v2116
    %v2150 = vunpack.c.l.b16 %v2117
    %v2151 = vunpack.c.l.b16 %v2118
    %v2152 = vunpack.c.l.b16 %v2119
    %v2153 = vunpack.c.l.b16 %v2120
    %v2154 = vpack.c.b16 %v2139, %v2138
    %v2155 = vpack.c.b16 %v2141, %v2140
    %v2156 = vpack.c.b16 %v2143, %v2142
    %v2157 = vpack.c.b16 %v2145, %v2144
    %v2158 = vpack.c.b16 %v2147, %v2146
    %v2159 = vpack.c.b16 %v2149, %v2148
    %v2160 = vpack.c.b16 %v2151, %v2150
    %v2161 = vpack.c.b16 %v2153, %v2152
    %2170 = vmatpush.bf16.msra.mxu0 %v2161
    %2171 = vmatpush.bf16.msra.mxu0 %v2160
    %2172 = vmatpush.bf16.msra.mxu0 %v2159
    %2173 = vmatpush.bf16.msra.mxu0 %v2158
    %2174 = vmatpush.bf16.msra.mxu0 %v2157
    %2175 = vmatpush.bf16.msra.mxu0 %v2156
    %2176 = vmatpush.bf16.msra.mxu0 %v2155
    %2177 = vmatpush.bf16.msra.mxu0 %v2154
    %2178 = vmatmul.bf16.gmra.mxu0 %v2104
    %v2179 = vpop.f32.mrf.mxu0
    %v2180 = vadd.f32 %v2121, %v2179
    %v2181 = vpop.f32.mrf.mxu0
    %2182 = vdwg.mxu0
    %v2183 = vxor.u32 %v2180, 2147483648
    %v2184 = vmul.f32 %v2183, 1.442695
    %v2185 = vpow.pop %v2184
    %v2186 = vadd.f32 %v2185, 1.0
    %v2187 = vrcp.pop %v2186
    %v2188 = vmul.f32 %v2186, %v2187
    %v2189 = vsub.f32 1.0, %v2188
    %v2190 = vmul.f32 %v2187, %v2189
    %v2191 = vadd.f32 %v2187, %v2190
    %vm2192 = vweird.f32 %v2186
    %vm2193 = vweird.f32 %v2187
    %vm2194 = vmor %vm2192, %vm2193
    %v2195 = vsel %vm2194, %v2187, %v2191
    %v2196 = vand.u32 2147483647, %v2186
    %vm2197 = vcmp.eq.f32.partialorder %v2196, 8.507059e+37
    %v2198 = vand.u32 %v2186, 2147483648
    %v2199 = vor.u32 1.1754944e-38, %v2198
    %v2200 = vsel %vm2197, %v2199, %v2195
    %v2201 = vmul.f32 1.0, %v2200
    %v2202 = vmul.f32 %v2180, %v2201
    %v2203 = vpack.c.bf16 %v2202, %v2202
    %v2204 = vld [vmem:[#allocation10] sm:$0xf]
    %v2205 = vld [vmem:[#allocation10 + $0x8] sm:$0xf]
    %v2206 = vld [vmem:[#allocation10 + $0x10] sm:$0xf]
    %v2207 = vld [vmem:[#allocation10 + $0x18] sm:$0xf]
    %v2208 = vld [vmem:[#allocation10 + $0x20] sm:$0xf]
    %v2209 = vld [vmem:[#allocation10 + $0x28] sm:$0xf]
    %v2210 = vld [vmem:[#allocation10 + $0x30] sm:$0xf]
    %v2211 = vld [vmem:[#allocation10 + $0x38] sm:$0xf]
    %v2212 = vld [vmem:[#allocation10 + $0x40] sm:$0xf]
    %v2213 = vld [vmem:[#allocation10 + $0x48] sm:$0xf]
    %v2214 = vld [vmem:[#allocation10 + $0x50] sm:$0xf]
    %v2215 = vld [vmem:[#allocation10 + $0x58] sm:$0xf]
    %v2216 = vld [vmem:[#allocation10 + $0x60] sm:$0xf]
    %v2217 = vld [vmem:[#allocation10 + $0x68] sm:$0xf]
    %v2218 = vld [vmem:[#allocation10 + $0x70] sm:$0xf]
    %v2219 = vld [vmem:[#allocation10 + $0x78] sm:$0xf]
    %v2220 = vld [vmem:[#allocation11 + $0x38] sm:$0xff]
    %v2237 = vunpack.c.l.b16 %v2204
    %v2238 = vunpack.c.l.b16 %v2205
    %v2239 = vunpack.c.l.b16 %v2206
    %v2240 = vunpack.c.l.b16 %v2207
    %v2241 = vunpack.c.l.b16 %v2208
    %v2242 = vunpack.c.l.b16 %v2209
    %v2243 = vunpack.c.l.b16 %v2210
    %v2244 = vunpack.c.l.b16 %v2211
    %v2245 = vunpack.c.l.b16 %v2212
    %v2246 = vunpack.c.l.b16 %v2213
    %v2247 = vunpack.c.l.b16 %v2214
    %v2248 = vunpack.c.l.b16 %v2215
    %v2249 = vunpack.c.l.b16 %v2216
    %v2250 = vunpack.c.l.b16 %v2217
    %v2251 = vunpack.c.l.b16 %v2218
    %v2252 = vunpack.c.l.b16 %v2219
    %v2253 = vpack.c.b16 %v2238, %v2237
    %v2254 = vpack.c.b16 %v2240, %v2239
    %v2255 = vpack.c.b16 %v2242, %v2241
    %v2256 = vpack.c.b16 %v2244, %v2243
    %v2257 = vpack.c.b16 %v2246, %v2245
    %v2258 = vpack.c.b16 %v2248, %v2247
    %v2259 = vpack.c.b16 %v2250, %v2249
    %v2260 = vpack.c.b16 %v2252, %v2251
    %2269 = vmatpush.bf16.msra.mxu0 %v2260
    %2270 = vmatpush.bf16.msra.mxu0 %v2259
    %2271 = vmatpush.bf16.msra.mxu0 %v2258
    %2272 = vmatpush.bf16.msra.mxu0 %v2257
    %2273 = vmatpush.bf16.msra.mxu0 %v2256
    %2274 = vmatpush.bf16.msra.mxu0 %v2255
    %2275 = vmatpush.bf16.msra.mxu0 %v2254
    %2276 = vmatpush.bf16.msra.mxu0 %v2253
    %2277 = vmatmul.bf16.gmra.mxu0 %v2203
    %v2278 = vpop.f32.mrf.mxu0
    %v2279 = vadd.f32 %v2220, %v2278
    %v2280 = vpop.f32.mrf.mxu0
    %2281 = vdwg.mxu0
    %v2282 = vmul.f32 %v2279, %v2103
    %v2283 = vadd.f32 %v2082, %v2282
    %v2284 = vpack.c.bf16 %v2283, %v2283
    %v2285 = vld [vmem:[#allocation8 + $0x14] sm:$0xf]
    %v2286 = vld [vmem:[#allocation8 + $0x2c] sm:$0xf]
    %v2287 = vld [vmem:[#allocation8 + $0x44] sm:$0xf]
    %v2288 = vld [vmem:[#allocation8 + $0x5c] sm:$0xf]
    %v2289 = vld [vmem:[#allocation8 + $0x74] sm:$0xf]
    %v2290 = vld [vmem:[#allocation8 + $0x8c] sm:$0xf]
    %v2291 = vld [vmem:[#allocation8 + $0xa4] sm:$0xf]
    %v2292 = vld [vmem:[#allocation8 + $0xbc] sm:$0xf]
    %v2293 = vld [vmem:[#allocation8 + $0xd4] sm:$0xf]
    %v2294 = vld [vmem:[#allocation8 + $0xec] sm:$0xf]
    %v2295 = vld [vmem:[#allocation8 + $0x104] sm:$0xf]
    %v2296 = vld [vmem:[#allocation8 + $0x11c] sm:$0xf]
    %v2297 = vld [vmem:[#allocation8 + $0x134] sm:$0xf]
    %v2298 = vld [vmem:[#allocation8 + $0x14c] sm:$0xf]
    %v2299 = vld [vmem:[#allocation8 + $0x164] sm:$0xf]
    %v2300 = vld [vmem:[#allocation8 + $0x17c] sm:$0xf]
    %v2301 = vld [vmem:[#allocation11 + $0x30] sm:$0xff]
    %v2318 = vunpack.c.l.b16 %v2285
    %v2319 = vunpack.c.l.b16 %v2286
    %v2320 = vunpack.c.l.b16 %v2287
    %v2321 = vunpack.c.l.b16 %v2288
    %v2322 = vunpack.c.l.b16 %v2289
    %v2323 = vunpack.c.l.b16 %v2290
    %v2324 = vunpack.c.l.b16 %v2291
    %v2325 = vunpack.c.l.b16 %v2292
    %v2326 = vunpack.c.l.b16 %v2293
    %v2327 = vunpack.c.l.b16 %v2294
    %v2328 = vunpack.c.l.b16 %v2295
    %v2329 = vunpack.c.l.b16 %v2296
    %v2330 = vunpack.c.l.b16 %v2297
    %v2331 = vunpack.c.l.b16 %v2298
    %v2332 = vunpack.c.l.b16 %v2299
    %v2333 = vunpack.c.l.b16 %v2300
    %v2334 = vpack.c.b16 %v2319, %v2318
    %v2335 = vpack.c.b16 %v2321, %v2320
    %v2336 = vpack.c.b16 %v2323, %v2322
    %v2337 = vpack.c.b16 %v2325, %v2324
    %v2338 = vpack.c.b16 %v2327, %v2326
    %v2339 = vpack.c.b16 %v2329, %v2328
    %v2340 = vpack.c.b16 %v2331, %v2330
    %v2341 = vpack.c.b16 %v2333, %v2332
    %2350 = vmatpush.bf16.msra.mxu0 %v2341
    %2351 = vmatpush.bf16.msra.mxu0 %v2340
    %2352 = vmatpush.bf16.msra.mxu0 %v2339
    %2353 = vmatpush.bf16.msra.mxu0 %v2338
    %2354 = vmatpush.bf16.msra.mxu0 %v2337
    %2355 = vmatpush.bf16.msra.mxu0 %v2336
    %2356 = vmatpush.bf16.msra.mxu0 %v2335
    %2357 = vmatpush.bf16.msra.mxu0 %v2334
    %2358 = vmatmul.bf16.gmra.mxu0 %v2284
    %v2359 = vpop.f32.mrf.mxu0
    %v2360 = vadd.f32 %v2301, %v2359
    %v2361 = vpop.f32.mrf.mxu0
    %2362 = vdwg.mxu0
    %v2363 = vxor.u32 %v2360, 2147483648
    %v2364 = vmul.f32 %v2363, 1.442695
    %v2365 = vpow.pop %v2364
    %v2366 = vadd.f32 %v2365, 1.0
    %v2367 = vrcp.pop %v2366
    %v2368 = vmul.f32 %v2366, %v2367
    %v2369 = vsub.f32 1.0, %v2368
    %v2370 = vmul.f32 %v2367, %v2369
    %v2371 = vadd.f32 %v2367, %v2370
    %vm2372 = vweird.f32 %v2366
    %vm2373 = vweird.f32 %v2367
    %vm2374 = vmor %vm2372, %vm2373
    %v2375 = vsel %vm2374, %v2367, %v2371
    %v2376 = vand.u32 2147483647, %v2366
    %vm2377 = vcmp.eq.f32.partialorder %v2376, 8.507059e+37
    %v2378 = vand.u32 %v2366, 2147483648
    %v2379 = vor.u32 1.1754944e-38, %v2378
    %v2380 = vsel %vm2377, %v2379, %v2375
    %v2381 = vmul.f32 1.0, %v2380
    %v2382 = vpack.c.bf16 %v2381, %v2381
    %v2383 = vld [vmem:[#allocation10 + $0x4] sm:$0xf]
    %v2384 = vld [vmem:[#allocation10 + $0xc] sm:$0xf]
    %v2385 = vld [vmem:[#allocation10 + $0x14] sm:$0xf]
    %v2386 = vld [vmem:[#allocation10 + $0x1c] sm:$0xf]
    %v2387 = vld [vmem:[#allocation10 + $0x24] sm:$0xf]
    %v2388 = vld [vmem:[#allocation10 + $0x2c] sm:$0xf]
    %v2389 = vld [vmem:[#allocation10 + $0x34] sm:$0xf]
    %v2390 = vld [vmem:[#allocation10 + $0x3c] sm:$0xf]
    %v2391 = vld [vmem:[#allocation10 + $0x44] sm:$0xf]
    %v2392 = vld [vmem:[#allocation10 + $0x4c] sm:$0xf]
    %v2393 = vld [vmem:[#allocation10 + $0x54] sm:$0xf]
    %v2394 = vld [vmem:[#allocation10 + $0x5c] sm:$0xf]
    %v2395 = vld [vmem:[#allocation10 + $0x64] sm:$0xf]
    %v2396 = vld [vmem:[#allocation10 + $0x6c] sm:$0xf]
    %v2397 = vld [vmem:[#allocation10 + $0x74] sm:$0xf]
    %v2398 = vld [vmem:[#allocation10 + $0x7c] sm:$0xf]
    %v2399 = vld [vmem:[#allocation5] sm:$0xff]
    %v2400 = vpack.c.bf16 %v2399, %v2399
    %v2401 = vld [vmem:[%s5] sm:$0xf]
    %v2403 = vsel %vm1466, %v2400, 0
    %vm2405 = vcmask 1043456
    %v2407 = vsel %vm2405, %v2401, 0
    %2409 = vmatpush.bf16.msra.mxu0 0
    %2410 = vmatpush.bf16.msra.mxu0 0
    %2411 = vmatpush.bf16.msra.mxu0 0
    %2412 = vmatpush.bf16.msra.mxu0 0
    %2413 = vmatpush.bf16.msra.mxu0 0
    %2414 = vmatpush.bf16.msra.mxu0 0
    %2415 = vmatpush.bf16.msra.mxu0 0
    %2416 = vmatpush.bf16.msra.mxu0 %v2407
    %2417 = vmatmul.bf16.gmra.mxu0 %v2403
    %v2418 = vpop.f32.mrf.mxu0
    %v2419 = vadd.f32 0.0, %v2418
    %v2420 = vpop.f32.mrf.mxu0
    %2421 = vdwg.mxu0
    %v2438 = vunpack.c.l.b16 %v2383
    %v2439 = vunpack.c.l.b16 %v2384
    %v2440 = vunpack.c.l.b16 %v2385
    %v2441 = vunpack.c.l.b16 %v2386
    %v2442 = vunpack.c.l.b16 %v2387
    %v2443 = vunpack.c.l.b16 %v2388
    %v2444 = vunpack.c.l.b16 %v2389
    %v2445 = vunpack.c.l.b16 %v2390
    %v2446 = vunpack.c.l.b16 %v2391
    %v2447 = vunpack.c.l.b16 %v2392
    %v2448 = vunpack.c.l.b16 %v2393
    %v2449 = vunpack.c.l.b16 %v2394
    %v2450 = vunpack.c.l.b16 %v2395
    %v2451 = vunpack.c.l.b16 %v2396
    %v2452 = vunpack.c.l.b16 %v2397
    %v2453 = vunpack.c.l.b16 %v2398
    %v2454 = vpack.c.b16 %v2439, %v2438
    %v2455 = vpack.c.b16 %v2441, %v2440
    %v2456 = vpack.c.b16 %v2443, %v2442
    %v2457 = vpack.c.b16 %v2445, %v2444
    %v2458 = vpack.c.b16 %v2447, %v2446
    %v2459 = vpack.c.b16 %v2449, %v2448
    %v2460 = vpack.c.b16 %v2451, %v2450
    %v2461 = vpack.c.b16 %v2453, %v2452
    %2470 = vmatpush.bf16.msra.mxu0 %v2461
    %2471 = vmatpush.bf16.msra.mxu0 %v2460
    %2472 = vmatpush.bf16.msra.mxu0 %v2459
    %2473 = vmatpush.bf16.msra.mxu0 %v2458
    %2474 = vmatpush.bf16.msra.mxu0 %v2457
    %2475 = vmatpush.bf16.msra.mxu0 %v2456
    %2476 = vmatpush.bf16.msra.mxu0 %v2455
    %2477 = vmatpush.bf16.msra.mxu0 %v2454
    %2478 = vmatmul.bf16.gmra.mxu0 %v2382
    %v2479 = vpop.f32.mrf.mxu0
    %v2480 = vadd.f32 %v2419, %v2479
    %v2481 = vpop.f32.mrf.mxu0
    %2482 = vdwg.mxu0
    %v2483 = vld [vmem:[#allocation11 + $0x40] sm:$0xff]
    %v2484 = vadd.f32 %v2480, %v2483
    %2485 = vst [vmem:[#allocation13] sm:$0xff] %v2484
    // Predicated region
    $region54: #{tpu_custom_call.1} parent=1 // pred_check
      _
    $region55: #{tpu_custom_call.1} parent=1 // pred_check_branch
      %2487 = sbr.rel (0) target = $region57
    $region56: #{tpu_custom_call.1} parent=1 // pred_region
      %2489 = vsyncadd [#allocation4], 0
      %s2491 = sshll.u32 [#allocation13], 4
      %s2492 = int_to_ptr.vmem [resolvable:$true] %s2491
      %s2493 = sshll.u32 %s7, 4
      %s2494 = int_to_ptr.hbm [resolvable:$true] %s2493
      %2496 = dma.vmem_to_hbm [thread:$0]  %s2492, 128, %s2494, [#allocation4]
    $region57: #{tpu_custom_call.1} parent=1 // pred_fallthru
      _
    // Predicated region
    $region58: #{tpu_custom_call.1} parent=1 // pred_check
      _
    $region59: #{tpu_custom_call.1} parent=1 // pred_check_branch
      %2498 = sbr.rel (0) target = $region61
    $region60: #{tpu_custom_call.1} parent=1 // pred_region
      %2500 = dma.done [#allocation4], 128
    $region61: #{tpu_custom_call.1} parent=1 // pred_fallthru
      _
    %2501 = vsyncpa [#allocation3], 1
    %2502 = vsyncpa [#allocation6], 1
    %2503 = vsyncpa [#allocation9], 1
    %2504 = vsyncpa [#allocation12], 1
    %2505 = vsyncpa [#allocation4], 1

</llo_original>
